<compile_context>
chip_gen: v5e
topology: v5e:2x2
jax: 0.10.0
libtpu: 0.0.40
codegen_flags: <defaults>
</compile_context>

<pallas_src>
import functools

import jax
import jax.numpy as jnp
import numpy as np
from jax import lax
from jax.experimental import pallas as pl
from jax.experimental.pallas import tpu as pltpu


# ----------------------------------------------------------------------------
# Pallas kernel: fused (dense + LSTM1 + LSTM2 + output layer), single invocation
# ----------------------------------------------------------------------------
def _lstm_model_kernel(
    xf_ref,     # (T*Bp, I+E)  [x | forces], time-major, batch padded to Bp
    w1_ref,     # (I+E, 4H)    stacked layer-1 input weights (dense folded in)
    b1_ref,     # (1, 4H)      fused layer-1 bias (b_dense@W_ih1[I:] + b1)
    whh1_ref,   # (H, 4H)      layer-1 hidden-to-hidden
    w2_ref,     # (2H, 4H)     stacked [W_ih2; W_hh2]
    b2_ref,     # (1, 4H)      layer-2 bias (b_ih + b_hh)
    wo_ref,     # (H, O)       output layer weight
    bo_ref,     # (1, O)       output layer bias
    out_ref,    # (Bp, O)      output (last time step only)
    g_ref,      # VMEM scratch (T*Bp, 4H): hoisted layer-1 gate pre-activations
    *,
    seq_len,
    batch,
):
    T, Bp = seq_len, batch
    H = whh1_ref.shape[0]

    # ---- Hoisted layer-1 input projection for ALL timesteps (one big matmul).
    g_ref[...] = (
        jnp.dot(xf_ref[...], w1_ref[...], preferred_element_type=jnp.float32)
        + b1_ref[...]
    )

    # ---- Hoist loop-invariant loads / broadcasts / masks out of the recurrence.
    whh1 = whh1_ref[...]
    w2 = w2_ref[...]
    b2 = jnp.broadcast_to(b2_ref[...], (Bp, 4 * H))
    lane = lax.broadcasted_iota(jnp.int32, (Bp, 4 * H), 1)
    g_mask = (lane >= 2 * H) & (lane < 3 * H)          # tanh region of [i|f|g|o]

    def gate_math(gates, c_prev):
        # Full-vreg nonlinearities (EUP) + one select instead of four 32-lane
        # sub-vreg nonlinearities; slices are taken only once for the MAC.
        act = jnp.where(g_mask, jnp.tanh(gates), jax.nn.sigmoid(gates))
        i_g = act[:, 0 * H:1 * H]
        f_g = act[:, 1 * H:2 * H]
        g_g = act[:, 2 * H:3 * H]
        o_g = act[:, 3 * H:4 * H]
        c_new = f_g * c_prev + i_g * g_g
        h_new = o_g * jnp.tanh(c_new)
        return h_new, c_new

    zeros = jnp.zeros((Bp, H), jnp.float32)

    # ---- Prologue: layer-1 step 0 (h1 = c1 = 0  =>  gates are just g_ref[0:Bp]).
    h1, c1 = gate_math(g_ref[pl.ds(0, Bp), :], zeros)
    h2, c2 = zeros, zeros

    # ---- Pipelined recurrence: iteration t does layer-1 step t and layer-2
    #      step t-1 (independent chains within an iteration -> overlap).
    def step(t, carry):
        h1, c1, h2, c2 = carry
        row = pl.multiple_of(t * Bp, 8)
        gates1 = g_ref[pl.ds(row, Bp), :] + jnp.dot(
            h1, whh1, preferred_element_type=jnp.float32
        )
        h1_new, c1_new = gate_math(gates1, c1)

        gates2 = jnp.dot(
            jnp.concatenate([h1, h2], axis=-1), w2,
            preferred_element_type=jnp.float32,
        ) + b2
        h2_new, c2_new = gate_math(gates2, c2)
        return h1_new, c1_new, h2_new, c2_new

    h1, c1, h2, c2 = lax.fori_loop(1, T, step, (h1, c1, h2, c2), unroll=True)

    # ---- Epilogue: final layer-2 step consuming h1_{T-1}.
    gates2 = jnp.dot(
        jnp.concatenate([h1, h2], axis=-1), w2,
        preferred_element_type=jnp.float32,
    ) + b2
    h2_last, _ = gate_math(gates2, c2)

    # ---- Output layer on the last time step only.
    out_ref[...] = (
        jnp.dot(h2_last, wo_ref[...], preferred_element_type=jnp.float32)
        + bo_ref[...]
    ).astype(out_ref.dtype)


# ----------------------------------------------------------------------------
# Wrapper
# ----------------------------------------------------------------------------
@jax.jit
def lstm_model_forward(input_seq, external_forces, params):
    """input_seq: (B, 1, I, T) like PyTorch; external_forces: (B, T, E)."""
    # Glue: squeeze(1) + transpose(1, 2)  ->  (B, T, I)
    x = jnp.transpose(jnp.squeeze(input_seq, axis=1), (0, 2, 1))
    f = external_forces

    B, T, I = x.shape
    E = f.shape[-1]
    H = params["w_hh1"].shape[0]
    O = params["w_out"].shape[-1]

    # Pad batch (sublane) dim to the native f32 tile of 8.
    Bp = max(8, ((B + 7) // 8) * 8)

    # Single time-major input slab: [x | forces] so the hoisted layer-1
    # projection is ONE matmul in the kernel.
    xf = jnp.concatenate([x, f], axis=-1)                  # (B, T, I+E)
    xf = jnp.transpose(xf, (1, 0, 2))                      # (T, B, I+E)
    xf = jnp.pad(xf, ((0, 0), (0, Bp - B), (0, 0)))        # (T, Bp, I+E)
    xf_tb = xf.reshape(T * Bp, I + E)

    # Fold the dense force projection into the layer-1 input weights/bias and
    # vstack with the x-side weights.
    w_ih1 = params["w_ih1"]
    wf1 = jnp.dot(params["w_dense"], w_ih1[I:, :],
                  precision=lax.Precision.HIGHEST)                        # (E, 4H)
    w1s = jnp.concatenate([w_ih1[:I, :], wf1], axis=0)                    # (I+E, 4H)
    b1f = jnp.dot(params["b_dense"], w_ih1[I:, :],
                  precision=lax.Precision.HIGHEST) + params["b1"]         # (1, 4H)

    # Stacked layer-2 weight so per-step projection is one matmul.
    w2s = jnp.concatenate([params["w_ih2"], params["w_hh2"]], axis=0)     # (2H, 4H)

    kernel = functools.partial(_lstm_model_kernel, seq_len=T, batch=Bp)
    vmem_spec = pl.BlockSpec(memory_space=pltpu.MemorySpace.VMEM)

    out = pl.pallas_call(
        kernel,
        out_shape=jax.ShapeDtypeStruct((Bp, O), jnp.float32),
        in_specs=[vmem_spec] * 8,
        out_specs=vmem_spec,
        scratch_shapes=[
            pltpu.VMEM((T * Bp, 4 * H), jnp.float32),   # hoisted gate pre-acts
        ],
    )(
        xf_tb,
        w1s, b1f, params["w_hh1"],
        w2s, params["b2"],
        params["w_out"], params["b_out"],
    )
    # Drop batch padding, restore (B, 1, O).
    return out[:B, None, :]


# ----------------------------------------------------------------------------
# Pure-JAX reference (mirrors the PyTorch forward exactly, f32 matmul precision)
# ----------------------------------------------------------------------------
def lstm_model_reference(input_seq, external_forces, params):
    with jax.default_matmul_precision("float32"):
        x = jnp.transpose(jnp.squeeze(input_seq, axis=1), (0, 2, 1))   # (B, T, I)
        aligned = external_forces @ params["w_dense"] + params["b_dense"]
        combined = jnp.concatenate([x, aligned], axis=-1)              # (B, T, I+D)
        H = params["w_hh1"].shape[0]

        def run_lstm(seq, w_ih, w_hh, b):
            def step(carry, x_t):
                h, c = carry
                gates = x_t @ w_ih + h @ w_hh + b
                i_g = jax.nn.sigmoid(gates[:, 0 * H:1 * H])
                f_g = jax.nn.sigmoid(gates[:, 1 * H:2 * H])
                g_g = jnp.tanh(gates[:, 2 * H:3 * H])
                o_g = jax.nn.sigmoid(gates[:, 3 * H:4 * H])
                c_new = f_g * c + i_g * g_g
                h_new = o_g * jnp.tanh(c_new)
                return (h_new, c_new), h_new

            init = (jnp.zeros((seq.shape[0], H)), jnp.zeros((seq.shape[0], H)))
            _, hs = lax.scan(step, init, jnp.swapaxes(seq, 0, 1))
            return jnp.swapaxes(hs, 0, 1)

        h1_seq = run_lstm(combined, params["w_ih1"], params["w_hh1"], params["b1"])
        h2_seq = run_lstm(h1_seq, params["w_ih2"], params["w_hh2"], params["b2"])
        out = h2_seq[:, -1, :] @ params["w_out"] + params["b_out"]
        return out[:, None, :]


# ----------------------------------------------------------------------------
# Main
# ----------------------------------------------------------------------------
if __name__ == "__main__":
    # Small, forward-consistent shapes.
    B, T = 4, 8
    input_size = 16
    external_forces_size = 8
    dense_output_size = 8
    hidden_size = 32
    output_size = 16

    key = jax.random.PRNGKey(0)
    keys = jax.random.split(key, 16)

    I, E, D, H, O = (input_size, external_forces_size, dense_output_size,
                     hidden_size, output_size)
    scale = 0.1

    # Deterministic synthetic parameters (stored as (in, out); PyTorch gate order i,f,g,o).
    params = {
        "w_dense": scale * jax.random.normal(keys[0], (E, D), jnp.float32),
        "b_dense": scale * jax.random.normal(keys[1], (1, D), jnp.float32),
        "w_ih1":   scale * jax.random.normal(keys[2], (I + D, 4 * H), jnp.float32),
        "w_hh1":   scale * jax.random.normal(keys[3], (H, 4 * H), jnp.float32),
        "b1":      scale * jax.random.normal(keys[4], (1, 4 * H), jnp.float32),
        "w_ih2":   scale * jax.random.normal(keys[5], (H, 4 * H), jnp.float32),
        "w_hh2":   scale * jax.random.normal(keys[6], (H, 4 * H), jnp.float32),
        "b2":      scale * jax.random.normal(keys[7], (1, 4 * H), jnp.float32),
        "w_out":   scale * jax.random.normal(keys[8], (H, O), jnp.float32),
        "b_out":   scale * jax.random.normal(keys[9], (1, O), jnp.float32),
    }

    # Inputs (input_seq in PyTorch layout (B, 1, input_size, seq_len)).
    input_seq = jax.random.normal(keys[10], (B, 1, I, T), jnp.float32)
    external_forces = jax.random.normal(keys[11], (B, T, E), jnp.float32)

    out = lstm_model_forward(input_seq, external_forces, params)
    out = jax.block_until_ready(out)

    ref = lstm_model_reference(input_seq, external_forces, params)
    ref = jax.block_until_ready(ref)

    assert out.shape == (B, 1, O), f"bad output shape: {out.shape}"
    np.testing.assert_allclose(np.asarray(out), np.asarray(ref), rtol=1e-5, atol=1e-5)

    print("KERNEL_OK")
</pallas_src>

<mosaic_0001>
module attributes {stable_mosaic.version = 11 : i64} {
  func.func @_lstm_model_kernel(%arg0: memref<64x24xf32, #tpu.memory_space<vmem>>, %arg1: memref<24x128xf32, #tpu.memory_space<vmem>>, %arg2: memref<1x128xf32, #tpu.memory_space<vmem>>, %arg3: memref<32x128xf32, #tpu.memory_space<vmem>>, %arg4: memref<64x128xf32, #tpu.memory_space<vmem>>, %arg5: memref<1x128xf32, #tpu.memory_space<vmem>>, %arg6: memref<32x16xf32, #tpu.memory_space<vmem>>, %arg7: memref<1x16xf32, #tpu.memory_space<vmem>>, %arg8: memref<8x16xf32, #tpu.memory_space<vmem>>, %arg9: memref<64x128xf32, #tpu.memory_space<vmem>>) attributes {dimension_semantics = [], scalar_prefetch = 0 : i64, scratch_operands = 1 : i64, tpu.core_type = #tpu.core_type<tc>} {
    %c0 = arith.constant 0 : index
    %c0_0 = arith.constant 0 : index
    %0 = vector.load %arg0[%c0, %c0_0] : memref<64x24xf32, #tpu.memory_space<vmem>>, vector<64x24xf32>
    %c0_1 = arith.constant 0 : index
    %c0_2 = arith.constant 0 : index
    %1 = vector.load %arg1[%c0_1, %c0_2] : memref<24x128xf32, #tpu.memory_space<vmem>>, vector<24x128xf32>
    %cst = arith.constant dense<0.000000e+00> : vector<64x128xf32>
    %2 = tpu.matmul %0, %1, %cst {dimension_numbers = #tpu.dot_dimension_numbers<[1], [0], [0], [1], [0, 0, 1, 1], [], []>} : vector<64x24xf32>, vector<24x128xf32>, vector<64x128xf32> -> vector<64x128xf32>
    %c0_3 = arith.constant 0 : index
    %c0_4 = arith.constant 0 : index
    %3 = vector.load %arg2[%c0_3, %c0_4] : memref<1x128xf32, #tpu.memory_space<vmem>>, vector<1x128xf32>
    %4 = vector.broadcast %3 : vector<1x128xf32> to vector<64x128xf32>
    %5 = arith.addf %2, %4 : vector<64x128xf32>
    %c0_5 = arith.constant 0 : index
    %c0_6 = arith.constant 0 : index
    %6 = vector.load %arg9[%c0_5, %c0_6] : memref<64x128xf32, #tpu.memory_space<vmem>>, vector<64x128xf32>
    tpu.vector_store %arg9[%c0_5, %c0_6], %5 {strides = array<i32>} : memref<64x128xf32, #tpu.memory_space<vmem>>, vector<64x128xf32>,
    %c0_7 = arith.constant 0 : index
    %c0_8 = arith.constant 0 : index
    %7 = vector.load %arg3[%c0_7, %c0_8] : memref<32x128xf32, #tpu.memory_space<vmem>>, vector<32x128xf32>
    %c0_9 = arith.constant 0 : index
    %c0_10 = arith.constant 0 : index
    %8 = vector.load %arg4[%c0_9, %c0_10] : memref<64x128xf32, #tpu.memory_space<vmem>>, vector<64x128xf32>
    %c0_11 = arith.constant 0 : index
    %c0_12 = arith.constant 0 : index
    %9 = vector.load %arg5[%c0_11, %c0_12] : memref<1x128xf32, #tpu.memory_space<vmem>>, vector<1x128xf32>
    %10 = vector.shape_cast %9 : vector<1x128xf32> to vector<1x128xf32>
    %11 = vector.broadcast %10 : vector<1x128xf32> to vector<8x128xf32>
    %12 = tpu.iota {dimensions = array<i32: 1>} : vector<8x128xi32>
    %c64_i32 = arith.constant 64 : i32
    %13 = vector.broadcast %c64_i32 : i32 to vector<8x128xi32>
    %14 = arith.cmpi sge, %12, %13 : vector<8x128xi32>
    %c96_i32 = arith.constant 96 : i32
    %15 = vector.broadcast %c96_i32 : i32 to vector<8x128xi32>
    %16 = arith.cmpi slt, %12, %15 : vector<8x128xi32>
    %17 = arith.andi %14, %16 : vector<8x128xi1>
    %cst_13 = arith.constant 0.000000e+00 : f32
    %18 = vector.broadcast %cst_13 : f32 to vector<8x32xf32>
    %c0_14 = arith.constant 0 : index
    %c0_15 = arith.constant 0 : index
    %19 = vector.load %arg9[%c0_14, %c0_15] : memref<64x128xf32, #tpu.memory_space<vmem>>, vector<8x128xf32>
    %20 = math.tanh %19 : vector<8x128xf32>
    %21 = arith.negf %19 : vector<8x128xf32>
    %22 = math.exp %21 : vector<8x128xf32>
    %cst_16 = arith.constant 1.000000e+00 : f32
    %23 = vector.broadcast %cst_16 : f32 to vector<8x128xf32>
    %24 = arith.addf %23, %22 : vector<8x128xf32>
    %25 = arith.divf %23, %24 : vector<8x128xf32>
    %26 = arith.select %17, %20, %25 : vector<8x128xi1>, vector<8x128xf32>
    %27 = vector.extract_strided_slice %26 {offsets = [0, 0], sizes = [8, 32], strides = [1, 1]} : vector<8x128xf32> to vector<8x32xf32>
    %28 = vector.extract_strided_slice %26 {offsets = [0, 32], sizes = [8, 32], strides = [1, 1]} : vector<8x128xf32> to vector<8x32xf32>
    %29 = vector.extract_strided_slice %26 {offsets = [0, 64], sizes = [8, 32], strides = [1, 1]} : vector<8x128xf32> to vector<8x32xf32>
    %30 = vector.extract_strided_slice %26 {offsets = [0, 96], sizes = [8, 32], strides = [1, 1]} : vector<8x128xf32> to vector<8x32xf32>
    %31 = arith.mulf %28, %18 : vector<8x32xf32>
    %32 = arith.mulf %27, %29 : vector<8x32xf32>
    %33 = arith.addf %31, %32 : vector<8x32xf32>
    %34 = math.tanh %33 : vector<8x32xf32>
    %35 = arith.mulf %30, %34 : vector<8x32xf32>
    %c1_i32 = arith.constant 1 : i32
    %c8_i32 = arith.constant 8 : i32
    %36 = arith.muli %c1_i32, %c8_i32 : i32
    %37 = tpu.assume_multiple %36, 8 : i32
    %38 = arith.index_cast %37 : i32 to index
    %c0_17 = arith.constant 0 : index
    %39 = vector.load %arg9[%38, %c0_17] : memref<64x128xf32, #tpu.memory_space<vmem>>, vector<8x128xf32>
    %cst_18 = arith.constant dense<0.000000e+00> : vector<8x128xf32>
    %40 = tpu.matmul %35, %7, %cst_18 {dimension_numbers = #tpu.dot_dimension_numbers<[1], [0], [0], [1], [0, 0, 1, 1], [], []>} : vector<8x32xf32>, vector<32x128xf32>, vector<8x128xf32> -> vector<8x128xf32>
    %41 = arith.addf %39, %40 : vector<8x128xf32>
    %42 = math.tanh %41 : vector<8x128xf32>
    %43 = arith.negf %41 : vector<8x128xf32>
    %44 = math.exp %43 : vector<8x128xf32>
    %cst_19 = arith.constant 1.000000e+00 : f32
    %45 = vector.broadcast %cst_19 : f32 to vector<8x128xf32>
    %46 = arith.addf %45, %44 : vector<8x128xf32>
    %47 = arith.divf %45, %46 : vector<8x128xf32>
    %48 = arith.select %17, %42, %47 : vector<8x128xi1>, vector<8x128xf32>
    %49 = vector.extract_strided_slice %48 {offsets = [0, 0], sizes = [8, 32], strides = [1, 1]} : vector<8x128xf32> to vector<8x32xf32>
    %50 = vector.extract_strided_slice %48 {offsets = [0, 32], sizes = [8, 32], strides = [1, 1]} : vector<8x128xf32> to vector<8x32xf32>
    %51 = vector.extract_strided_slice %48 {offsets = [0, 64], sizes = [8, 32], strides = [1, 1]} : vector<8x128xf32> to vector<8x32xf32>
    %52 = vector.extract_strided_slice %48 {offsets = [0, 96], sizes = [8, 32], strides = [1, 1]} : vector<8x128xf32> to vector<8x32xf32>
    %53 = arith.mulf %50, %33 : vector<8x32xf32>
    %54 = arith.mulf %49, %51 : vector<8x32xf32>
    %55 = arith.addf %53, %54 : vector<8x32xf32>
    %56 = math.tanh %55 : vector<8x32xf32>
    %57 = arith.mulf %52, %56 : vector<8x32xf32>
    %58 = tpu.concatenate %35, %18 in 1 : vector<8x32xf32>, vector<8x32xf32> -> vector<8x64xf32>
    %cst_20 = arith.constant dense<0.000000e+00> : vector<8x128xf32>
    %59 = tpu.matmul %58, %8, %cst_20 {dimension_numbers = #tpu.dot_dimension_numbers<[1], [0], [0], [1], [0, 0, 1, 1], [], []>} : vector<8x64xf32>, vector<64x128xf32>, vector<8x128xf32> -> vector<8x128xf32>
    %60 = arith.addf %59, %11 : vector<8x128xf32>
    %61 = math.tanh %60 : vector<8x128xf32>
    %62 = arith.negf %60 : vector<8x128xf32>
    %63 = math.exp %62 : vector<8x128xf32>
    %cst_21 = arith.constant 1.000000e+00 : f32
    %64 = vector.broadcast %cst_21 : f32 to vector<8x128xf32>
    %65 = arith.addf %64, %63 : vector<8x128xf32>
    %66 = arith.divf %64, %65 : vector<8x128xf32>
    %67 = arith.select %17, %61, %66 : vector<8x128xi1>, vector<8x128xf32>
    %68 = vector.extract_strided_slice %67 {offsets = [0, 0], sizes = [8, 32], strides = [1, 1]} : vector<8x128xf32> to vector<8x32xf32>
    %69 = vector.extract_strided_slice %67 {offsets = [0, 32], sizes = [8, 32], strides = [1, 1]} : vector<8x128xf32> to vector<8x32xf32>
    %70 = vector.extract_strided_slice %67 {offsets = [0, 64], sizes = [8, 32], strides = [1, 1]} : vector<8x128xf32> to vector<8x32xf32>
    %71 = vector.extract_strided_slice %67 {offsets = [0, 96], sizes = [8, 32], strides = [1, 1]} : vector<8x128xf32> to vector<8x32xf32>
    %72 = arith.mulf %69, %18 : vector<8x32xf32>
    %73 = arith.mulf %68, %70 : vector<8x32xf32>
    %74 = arith.addf %72, %73 : vector<8x32xf32>
    %75 = math.tanh %74 : vector<8x32xf32>
    %76 = arith.mulf %71, %75 : vector<8x32xf32>
    %c2_i32 = arith.constant 2 : i32
    %c8_i32_22 = arith.constant 8 : i32
    %77 = arith.muli %c2_i32, %c8_i32_22 : i32
    %78 = tpu.assume_multiple %77, 8 : i32
    %79 = arith.index_cast %78 : i32 to index
    %c0_23 = arith.constant 0 : index
    %80 = vector.load %arg9[%79, %c0_23] : memref<64x128xf32, #tpu.memory_space<vmem>>, vector<8x128xf32>
    %cst_24 = arith.constant dense<0.000000e+00> : vector<8x128xf32>
    %81 = tpu.matmul %57, %7, %cst_24 {dimension_numbers = #tpu.dot_dimension_numbers<[1], [0], [0], [1], [0, 0, 1, 1], [], []>} : vector<8x32xf32>, vector<32x128xf32>, vector<8x128xf32> -> vector<8x128xf32>
    %82 = arith.addf %80, %81 : vector<8x128xf32>
    %83 = math.tanh %82 : vector<8x128xf32>
    %84 = arith.negf %82 : vector<8x128xf32>
    %85 = math.exp %84 : vector<8x128xf32>
    %cst_25 = arith.constant 1.000000e+00 : f32
    %86 = vector.broadcast %cst_25 : f32 to vector<8x128xf32>
    %87 = arith.addf %86, %85 : vector<8x128xf32>
    %88 = arith.divf %86, %87 : vector<8x128xf32>
    %89 = arith.select %17, %83, %88 : vector<8x128xi1>, vector<8x128xf32>
    %90 = vector.extract_strided_slice %89 {offsets = [0, 0], sizes = [8, 32], strides = [1, 1]} : vector<8x128xf32> to vector<8x32xf32>
    %91 = vector.extract_strided_slice %89 {offsets = [0, 32], sizes = [8, 32], strides = [1, 1]} : vector<8x128xf32> to vector<8x32xf32>
    %92 = vector.extract_strided_slice %89 {offsets = [0, 64], sizes = [8, 32], strides = [1, 1]} : vector<8x128xf32> to vector<8x32xf32>
    %93 = vector.extract_strided_slice %89 {offsets = [0, 96], sizes = [8, 32], strides = [1, 1]} : vector<8x128xf32> to vector<8x32xf32>
    %94 = arith.mulf %91, %55 : vector<8x32xf32>
    %95 = arith.mulf %90, %92 : vector<8x32xf32>
    %96 = arith.addf %94, %95 : vector<8x32xf32>
    %97 = math.tanh %96 : vector<8x32xf32>
    %98 = arith.mulf %93, %97 : vector<8x32xf32>
    %99 = tpu.concatenate %57, %76 in 1 : vector<8x32xf32>, vector<8x32xf32> -> vector<8x64xf32>
    %cst_26 = arith.constant dense<0.000000e+00> : vector<8x128xf32>
    %100 = tpu.matmul %99, %8, %cst_26 {dimension_numbers = #tpu.dot_dimension_numbers<[1], [0], [0], [1], [0, 0, 1, 1], [], []>} : vector<8x64xf32>, vector<64x128xf32>, vector<8x128xf32> -> vector<8x128xf32>
    %101 = arith.addf %100, %11 : vector<8x128xf32>
    %102 = math.tanh %101 : vector<8x128xf32>
    %103 = arith.negf %101 : vector<8x128xf32>
    %104 = math.exp %103 : vector<8x128xf32>
    %cst_27 = arith.constant 1.000000e+00 : f32
    %105 = vector.broadcast %cst_27 : f32 to vector<8x128xf32>
    %106 = arith.addf %105, %104 : vector<8x128xf32>
    %107 = arith.divf %105, %106 : vector<8x128xf32>
    %108 = arith.select %17, %102, %107 : vector<8x128xi1>, vector<8x128xf32>
    %109 = vector.extract_strided_slice %108 {offsets = [0, 0], sizes = [8, 32], strides = [1, 1]} : vector<8x128xf32> to vector<8x32xf32>
    %110 = vector.extract_strided_slice %108 {offsets = [0, 32], sizes = [8, 32], strides = [1, 1]} : vector<8x128xf32> to vector<8x32xf32>
    %111 = vector.extract_strided_slice %108 {offsets = [0, 64], sizes = [8, 32], strides = [1, 1]} : vector<8x128xf32> to vector<8x32xf32>
    %112 = vector.extract_strided_slice %108 {offsets = [0, 96], sizes = [8, 32], strides = [1, 1]} : vector<8x128xf32> to vector<8x32xf32>
    %113 = arith.mulf %110, %74 : vector<8x32xf32>
    %114 = arith.mulf %109, %111 : vector<8x32xf32>
    %115 = arith.addf %113, %114 : vector<8x32xf32>
    %116 = math.tanh %115 : vector<8x32xf32>
    %117 = arith.mulf %112, %116 : vector<8x32xf32>
    %c3_i32 = arith.constant 3 : i32
    %c8_i32_28 = arith.constant 8 : i32
    %118 = arith.muli %c3_i32, %c8_i32_28 : i32
    %119 = tpu.assume_multiple %118, 8 : i32
    %120 = arith.index_cast %119 : i32 to index
    %c0_29 = arith.constant 0 : index
    %121 = vector.load %arg9[%120, %c0_29] : memref<64x128xf32, #tpu.memory_space<vmem>>, vector<8x128xf32>
    %cst_30 = arith.constant dense<0.000000e+00> : vector<8x128xf32>
    %122 = tpu.matmul %98, %7, %cst_30 {dimension_numbers = #tpu.dot_dimension_numbers<[1], [0], [0], [1], [0, 0, 1, 1], [], []>} : vector<8x32xf32>, vector<32x128xf32>, vector<8x128xf32> -> vector<8x128xf32>
    %123 = arith.addf %121, %122 : vector<8x128xf32>
    %124 = math.tanh %123 : vector<8x128xf32>
    %125 = arith.negf %123 : vector<8x128xf32>
    %126 = math.exp %125 : vector<8x128xf32>
    %cst_31 = arith.constant 1.000000e+00 : f32
    %127 = vector.broadcast %cst_31 : f32 to vector<8x128xf32>
    %128 = arith.addf %127, %126 : vector<8x128xf32>
    %129 = arith.divf %127, %128 : vector<8x128xf32>
    %130 = arith.select %17, %124, %129 : vector<8x128xi1>, vector<8x128xf32>
    %131 = vector.extract_strided_slice %130 {offsets = [0, 0], sizes = [8, 32], strides = [1, 1]} : vector<8x128xf32> to vector<8x32xf32>
    %132 = vector.extract_strided_slice %130 {offsets = [0, 32], sizes = [8, 32], strides = [1, 1]} : vector<8x128xf32> to vector<8x32xf32>
    %133 = vector.extract_strided_slice %130 {offsets = [0, 64], sizes = [8, 32], strides = [1, 1]} : vector<8x128xf32> to vector<8x32xf32>
    %134 = vector.extract_strided_slice %130 {offsets = [0, 96], sizes = [8, 32], strides = [1, 1]} : vector<8x128xf32> to vector<8x32xf32>
    %135 = arith.mulf %132, %96 : vector<8x32xf32>
    %136 = arith.mulf %131, %133 : vector<8x32xf32>
    %137 = arith.addf %135, %136 : vector<8x32xf32>
    %138 = math.tanh %137 : vector<8x32xf32>
    %139 = arith.mulf %134, %138 : vector<8x32xf32>
    %140 = tpu.concatenate %98, %117 in 1 : vector<8x32xf32>, vector<8x32xf32> -> vector<8x64xf32>
    %cst_32 = arith.constant dense<0.000000e+00> : vector<8x128xf32>
    %141 = tpu.matmul %140, %8, %cst_32 {dimension_numbers = #tpu.dot_dimension_numbers<[1], [0], [0], [1], [0, 0, 1, 1], [], []>} : vector<8x64xf32>, vector<64x128xf32>, vector<8x128xf32> -> vector<8x128xf32>
    %142 = arith.addf %141, %11 : vector<8x128xf32>
    %143 = math.tanh %142 : vector<8x128xf32>
    %144 = arith.negf %142 : vector<8x128xf32>
    %145 = math.exp %144 : vector<8x128xf32>
    %cst_33 = arith.constant 1.000000e+00 : f32
    %146 = vector.broadcast %cst_33 : f32 to vector<8x128xf32>
    %147 = arith.addf %146, %145 : vector<8x128xf32>
    %148 = arith.divf %146, %147 : vector<8x128xf32>
    %149 = arith.select %17, %143, %148 : vector<8x128xi1>, vector<8x128xf32>
    %150 = vector.extract_strided_slice %149 {offsets = [0, 0], sizes = [8, 32], strides = [1, 1]} : vector<8x128xf32> to vector<8x32xf32>
    %151 = vector.extract_strided_slice %149 {offsets = [0, 32], sizes = [8, 32], strides = [1, 1]} : vector<8x128xf32> to vector<8x32xf32>
    %152 = vector.extract_strided_slice %149 {offsets = [0, 64], sizes = [8, 32], strides = [1, 1]} : vector<8x128xf32> to vector<8x32xf32>
    %153 = vector.extract_strided_slice %149 {offsets = [0, 96], sizes = [8, 32], strides = [1, 1]} : vector<8x128xf32> to vector<8x32xf32>
    %154 = arith.mulf %151, %115 : vector<8x32xf32>
    %155 = arith.mulf %150, %152 : vector<8x32xf32>
    %156 = arith.addf %154, %155 : vector<8x32xf32>
    %157 = math.tanh %156 : vector<8x32xf32>
    %158 = arith.mulf %153, %157 : vector<8x32xf32>
    %c4_i32 = arith.constant 4 : i32
    %c8_i32_34 = arith.constant 8 : i32
    %159 = arith.muli %c4_i32, %c8_i32_34 : i32
    %160 = tpu.assume_multiple %159, 8 : i32
    %161 = arith.index_cast %160 : i32 to index
    %c0_35 = arith.constant 0 : index
    %162 = vector.load %arg9[%161, %c0_35] : memref<64x128xf32, #tpu.memory_space<vmem>>, vector<8x128xf32>
    %cst_36 = arith.constant dense<0.000000e+00> : vector<8x128xf32>
    %163 = tpu.matmul %139, %7, %cst_36 {dimension_numbers = #tpu.dot_dimension_numbers<[1], [0], [0], [1], [0, 0, 1, 1], [], []>} : vector<8x32xf32>, vector<32x128xf32>, vector<8x128xf32> -> vector<8x128xf32>
    %164 = arith.addf %162, %163 : vector<8x128xf32>
    %165 = math.tanh %164 : vector<8x128xf32>
    %166 = arith.negf %164 : vector<8x128xf32>
    %167 = math.exp %166 : vector<8x128xf32>
    %cst_37 = arith.constant 1.000000e+00 : f32
    %168 = vector.broadcast %cst_37 : f32 to vector<8x128xf32>
    %169 = arith.addf %168, %167 : vector<8x128xf32>
    %170 = arith.divf %168, %169 : vector<8x128xf32>
    %171 = arith.select %17, %165, %170 : vector<8x128xi1>, vector<8x128xf32>
    %172 = vector.extract_strided_slice %171 {offsets = [0, 0], sizes = [8, 32], strides = [1, 1]} : vector<8x128xf32> to vector<8x32xf32>
    %173 = vector.extract_strided_slice %171 {offsets = [0, 32], sizes = [8, 32], strides = [1, 1]} : vector<8x128xf32> to vector<8x32xf32>
    %174 = vector.extract_strided_slice %171 {offsets = [0, 64], sizes = [8, 32], strides = [1, 1]} : vector<8x128xf32> to vector<8x32xf32>
    %175 = vector.extract_strided_slice %171 {offsets = [0, 96], sizes = [8, 32], strides = [1, 1]} : vector<8x128xf32> to vector<8x32xf32>
    %176 = arith.mulf %173, %137 : vector<8x32xf32>
    %177 = arith.mulf %172, %174 : vector<8x32xf32>
    %178 = arith.addf %176, %177 : vector<8x32xf32>
    %179 = math.tanh %178 : vector<8x32xf32>
    %180 = arith.mulf %175, %179 : vector<8x32xf32>
    %181 = tpu.concatenate %139, %158 in 1 : vector<8x32xf32>, vector<8x32xf32> -> vector<8x64xf32>
    %cst_38 = arith.constant dense<0.000000e+00> : vector<8x128xf32>
    %182 = tpu.matmul %181, %8, %cst_38 {dimension_numbers = #tpu.dot_dimension_numbers<[1], [0], [0], [1], [0, 0, 1, 1], [], []>} : vector<8x64xf32>, vector<64x128xf32>, vector<8x128xf32> -> vector<8x128xf32>
    %183 = arith.addf %182, %11 : vector<8x128xf32>
    %184 = math.tanh %183 : vector<8x128xf32>
    %185 = arith.negf %183 : vector<8x128xf32>
    %186 = math.exp %185 : vector<8x128xf32>
    %cst_39 = arith.constant 1.000000e+00 : f32
    %187 = vector.broadcast %cst_39 : f32 to vector<8x128xf32>
    %188 = arith.addf %187, %186 : vector<8x128xf32>
    %189 = arith.divf %187, %188 : vector<8x128xf32>
    %190 = arith.select %17, %184, %189 : vector<8x128xi1>, vector<8x128xf32>
    %191 = vector.extract_strided_slice %190 {offsets = [0, 0], sizes = [8, 32], strides = [1, 1]} : vector<8x128xf32> to vector<8x32xf32>
    %192 = vector.extract_strided_slice %190 {offsets = [0, 32], sizes = [8, 32], strides = [1, 1]} : vector<8x128xf32> to vector<8x32xf32>
    %193 = vector.extract_strided_slice %190 {offsets = [0, 64], sizes = [8, 32], strides = [1, 1]} : vector<8x128xf32> to vector<8x32xf32>
    %194 = vector.extract_strided_slice %190 {offsets = [0, 96], sizes = [8, 32], strides = [1, 1]} : vector<8x128xf32> to vector<8x32xf32>
    %195 = arith.mulf %192, %156 : vector<8x32xf32>
    %196 = arith.mulf %191, %193 : vector<8x32xf32>
    %197 = arith.addf %195, %196 : vector<8x32xf32>
    %198 = math.tanh %197 : vector<8x32xf32>
    %199 = arith.mulf %194, %198 : vector<8x32xf32>
    %c5_i32 = arith.constant 5 : i32
    %c8_i32_40 = arith.constant 8 : i32
    %200 = arith.muli %c5_i32, %c8_i32_40 : i32
    %201 = tpu.assume_multiple %200, 8 : i32
    %202 = arith.index_cast %201 : i32 to index
    %c0_41 = arith.constant 0 : index
    %203 = vector.load %arg9[%202, %c0_41] : memref<64x128xf32, #tpu.memory_space<vmem>>, vector<8x128xf32>
    %cst_42 = arith.constant dense<0.000000e+00> : vector<8x128xf32>
    %204 = tpu.matmul %180, %7, %cst_42 {dimension_numbers = #tpu.dot_dimension_numbers<[1], [0], [0], [1], [0, 0, 1, 1], [], []>} : vector<8x32xf32>, vector<32x128xf32>, vector<8x128xf32> -> vector<8x128xf32>
    %205 = arith.addf %203, %204 : vector<8x128xf32>
    %206 = math.tanh %205 : vector<8x128xf32>
    %207 = arith.negf %205 : vector<8x128xf32>
    %208 = math.exp %207 : vector<8x128xf32>
    %cst_43 = arith.constant 1.000000e+00 : f32
    %209 = vector.broadcast %cst_43 : f32 to vector<8x128xf32>
    %210 = arith.addf %209, %208 : vector<8x128xf32>
    %211 = arith.divf %209, %210 : vector<8x128xf32>
    %212 = arith.select %17, %206, %211 : vector<8x128xi1>, vector<8x128xf32>
    %213 = vector.extract_strided_slice %212 {offsets = [0, 0], sizes = [8, 32], strides = [1, 1]} : vector<8x128xf32> to vector<8x32xf32>
    %214 = vector.extract_strided_slice %212 {offsets = [0, 32], sizes = [8, 32], strides = [1, 1]} : vector<8x128xf32> to vector<8x32xf32>
    %215 = vector.extract_strided_slice %212 {offsets = [0, 64], sizes = [8, 32], strides = [1, 1]} : vector<8x128xf32> to vector<8x32xf32>
    %216 = vector.extract_strided_slice %212 {offsets = [0, 96], sizes = [8, 32], strides = [1, 1]} : vector<8x128xf32> to vector<8x32xf32>
    %217 = arith.mulf %214, %178 : vector<8x32xf32>
    %218 = arith.mulf %213, %215 : vector<8x32xf32>
    %219 = arith.addf %217, %218 : vector<8x32xf32>
    %220 = math.tanh %219 : vector<8x32xf32>
    %221 = arith.mulf %216, %220 : vector<8x32xf32>
    %222 = tpu.concatenate %180, %199 in 1 : vector<8x32xf32>, vector<8x32xf32> -> vector<8x64xf32>
    %cst_44 = arith.constant dense<0.000000e+00> : vector<8x128xf32>
    %223 = tpu.matmul %222, %8, %cst_44 {dimension_numbers = #tpu.dot_dimension_numbers<[1], [0], [0], [1], [0, 0, 1, 1], [], []>} : vector<8x64xf32>, vector<64x128xf32>, vector<8x128xf32> -> vector<8x128xf32>
    %224 = arith.addf %223, %11 : vector<8x128xf32>
    %225 = math.tanh %224 : vector<8x128xf32>
    %226 = arith.negf %224 : vector<8x128xf32>
    %227 = math.exp %226 : vector<8x128xf32>
    %cst_45 = arith.constant 1.000000e+00 : f32
    %228 = vector.broadcast %cst_45 : f32 to vector<8x128xf32>
    %229 = arith.addf %228, %227 : vector<8x128xf32>
    %230 = arith.divf %228, %229 : vector<8x128xf32>
    %231 = arith.select %17, %225, %230 : vector<8x128xi1>, vector<8x128xf32>
    %232 = vector.extract_strided_slice %231 {offsets = [0, 0], sizes = [8, 32], strides = [1, 1]} : vector<8x128xf32> to vector<8x32xf32>
    %233 = vector.extract_strided_slice %231 {offsets = [0, 32], sizes = [8, 32], strides = [1, 1]} : vector<8x128xf32> to vector<8x32xf32>
    %234 = vector.extract_strided_slice %231 {offsets = [0, 64], sizes = [8, 32], strides = [1, 1]} : vector<8x128xf32> to vector<8x32xf32>
    %235 = vector.extract_strided_slice %231 {offsets = [0, 96], sizes = [8, 32], strides = [1, 1]} : vector<8x128xf32> to vector<8x32xf32>
    %236 = arith.mulf %233, %197 : vector<8x32xf32>
    %237 = arith.mulf %232, %234 : vector<8x32xf32>
    %238 = arith.addf %236, %237 : vector<8x32xf32>
    %239 = math.tanh %238 : vector<8x32xf32>
    %240 = arith.mulf %235, %239 : vector<8x32xf32>
    %c6_i32 = arith.constant 6 : i32
    %c8_i32_46 = arith.constant 8 : i32
    %241 = arith.muli %c6_i32, %c8_i32_46 : i32
    %242 = tpu.assume_multiple %241, 8 : i32
    %243 = arith.index_cast %242 : i32 to index
    %c0_47 = arith.constant 0 : index
    %244 = vector.load %arg9[%243, %c0_47] : memref<64x128xf32, #tpu.memory_space<vmem>>, vector<8x128xf32>
    %cst_48 = arith.constant dense<0.000000e+00> : vector<8x128xf32>
    %245 = tpu.matmul %221, %7, %cst_48 {dimension_numbers = #tpu.dot_dimension_numbers<[1], [0], [0], [1], [0, 0, 1, 1], [], []>} : vector<8x32xf32>, vector<32x128xf32>, vector<8x128xf32> -> vector<8x128xf32>
    %246 = arith.addf %244, %245 : vector<8x128xf32>
    %247 = math.tanh %246 : vector<8x128xf32>
    %248 = arith.negf %246 : vector<8x128xf32>
    %249 = math.exp %248 : vector<8x128xf32>
    %cst_49 = arith.constant 1.000000e+00 : f32
    %250 = vector.broadcast %cst_49 : f32 to vector<8x128xf32>
    %251 = arith.addf %250, %249 : vector<8x128xf32>
    %252 = arith.divf %250, %251 : vector<8x128xf32>
    %253 = arith.select %17, %247, %252 : vector<8x128xi1>, vector<8x128xf32>
    %254 = vector.extract_strided_slice %253 {offsets = [0, 0], sizes = [8, 32], strides = [1, 1]} : vector<8x128xf32> to vector<8x32xf32>
    %255 = vector.extract_strided_slice %253 {offsets = [0, 32], sizes = [8, 32], strides = [1, 1]} : vector<8x128xf32> to vector<8x32xf32>
    %256 = vector.extract_strided_slice %253 {offsets = [0, 64], sizes = [8, 32], strides = [1, 1]} : vector<8x128xf32> to vector<8x32xf32>
    %257 = vector.extract_strided_slice %253 {offsets = [0, 96], sizes = [8, 32], strides = [1, 1]} : vector<8x128xf32> to vector<8x32xf32>
    %258 = arith.mulf %255, %219 : vector<8x32xf32>
    %259 = arith.mulf %254, %256 : vector<8x32xf32>
    %260 = arith.addf %258, %259 : vector<8x32xf32>
    %261 = math.tanh %260 : vector<8x32xf32>
    %262 = arith.mulf %257, %261 : vector<8x32xf32>
    %263 = tpu.concatenate %221, %240 in 1 : vector<8x32xf32>, vector<8x32xf32> -> vector<8x64xf32>
    %cst_50 = arith.constant dense<0.000000e+00> : vector<8x128xf32>
    %264 = tpu.matmul %263, %8, %cst_50 {dimension_numbers = #tpu.dot_dimension_numbers<[1], [0], [0], [1], [0, 0, 1, 1], [], []>} : vector<8x64xf32>, vector<64x128xf32>, vector<8x128xf32> -> vector<8x128xf32>
    %265 = arith.addf %264, %11 : vector<8x128xf32>
    %266 = math.tanh %265 : vector<8x128xf32>
    %267 = arith.negf %265 : vector<8x128xf32>
    %268 = math.exp %267 : vector<8x128xf32>
    %cst_51 = arith.constant 1.000000e+00 : f32
    %269 = vector.broadcast %cst_51 : f32 to vector<8x128xf32>
    %270 = arith.addf %269, %268 : vector<8x128xf32>
    %271 = arith.divf %269, %270 : vector<8x128xf32>
    %272 = arith.select %17, %266, %271 : vector<8x128xi1>, vector<8x128xf32>
    %273 = vector.extract_strided_slice %272 {offsets = [0, 0], sizes = [8, 32], strides = [1, 1]} : vector<8x128xf32> to vector<8x32xf32>
    %274 = vector.extract_strided_slice %272 {offsets = [0, 32], sizes = [8, 32], strides = [1, 1]} : vector<8x128xf32> to vector<8x32xf32>
    %275 = vector.extract_strided_slice %272 {offsets = [0, 64], sizes = [8, 32], strides = [1, 1]} : vector<8x128xf32> to vector<8x32xf32>
    %276 = vector.extract_strided_slice %272 {offsets = [0, 96], sizes = [8, 32], strides = [1, 1]} : vector<8x128xf32> to vector<8x32xf32>
    %277 = arith.mulf %274, %238 : vector<8x32xf32>
    %278 = arith.mulf %273, %275 : vector<8x32xf32>
    %279 = arith.addf %277, %278 : vector<8x32xf32>
    %280 = math.tanh %279 : vector<8x32xf32>
    %281 = arith.mulf %276, %280 : vector<8x32xf32>
    %c7_i32 = arith.constant 7 : i32
    %c8_i32_52 = arith.constant 8 : i32
    %282 = arith.muli %c7_i32, %c8_i32_52 : i32
    %283 = tpu.assume_multiple %282, 8 : i32
    %284 = arith.index_cast %283 : i32 to index
    %c0_53 = arith.constant 0 : index
    %285 = vector.load %arg9[%284, %c0_53] : memref<64x128xf32, #tpu.memory_space<vmem>>, vector<8x128xf32>
    %cst_54 = arith.constant dense<0.000000e+00> : vector<8x128xf32>
    %286 = tpu.matmul %262, %7, %cst_54 {dimension_numbers = #tpu.dot_dimension_numbers<[1], [0], [0], [1], [0, 0, 1, 1], [], []>} : vector<8x32xf32>, vector<32x128xf32>, vector<8x128xf32> -> vector<8x128xf32>
    %287 = arith.addf %285, %286 : vector<8x128xf32>
    %288 = math.tanh %287 : vector<8x128xf32>
    %289 = arith.negf %287 : vector<8x128xf32>
    %290 = math.exp %289 : vector<8x128xf32>
    %cst_55 = arith.constant 1.000000e+00 : f32
    %291 = vector.broadcast %cst_55 : f32 to vector<8x128xf32>
    %292 = arith.addf %291, %290 : vector<8x128xf32>
    %293 = arith.divf %291, %292 : vector<8x128xf32>
    %294 = arith.select %17, %288, %293 : vector<8x128xi1>, vector<8x128xf32>
    %295 = vector.extract_strided_slice %294 {offsets = [0, 0], sizes = [8, 32], strides = [1, 1]} : vector<8x128xf32> to vector<8x32xf32>
    %296 = vector.extract_strided_slice %294 {offsets = [0, 32], sizes = [8, 32], strides = [1, 1]} : vector<8x128xf32> to vector<8x32xf32>
    %297 = vector.extract_strided_slice %294 {offsets = [0, 64], sizes = [8, 32], strides = [1, 1]} : vector<8x128xf32> to vector<8x32xf32>
    %298 = vector.extract_strided_slice %294 {offsets = [0, 96], sizes = [8, 32], strides = [1, 1]} : vector<8x128xf32> to vector<8x32xf32>
    %299 = arith.mulf %296, %260 : vector<8x32xf32>
    %300 = arith.mulf %295, %297 : vector<8x32xf32>
    %301 = arith.addf %299, %300 : vector<8x32xf32>
    %302 = math.tanh %301 : vector<8x32xf32>
    %303 = arith.mulf %298, %302 : vector<8x32xf32>
    %304 = tpu.concatenate %262, %281 in 1 : vector<8x32xf32>, vector<8x32xf32> -> vector<8x64xf32>
    %cst_56 = arith.constant dense<0.000000e+00> : vector<8x128xf32>
    %305 = tpu.matmul %304, %8, %cst_56 {dimension_numbers = #tpu.dot_dimension_numbers<[1], [0], [0], [1], [0, 0, 1, 1], [], []>} : vector<8x64xf32>, vector<64x128xf32>, vector<8x128xf32> -> vector<8x128xf32>
    %306 = arith.addf %305, %11 : vector<8x128xf32>
    %307 = math.tanh %306 : vector<8x128xf32>
    %308 = arith.negf %306 : vector<8x128xf32>
    %309 = math.exp %308 : vector<8x128xf32>
    %cst_57 = arith.constant 1.000000e+00 : f32
    %310 = vector.broadcast %cst_57 : f32 to vector<8x128xf32>
    %311 = arith.addf %310, %309 : vector<8x128xf32>
    %312 = arith.divf %310, %311 : vector<8x128xf32>
    %313 = arith.select %17, %307, %312 : vector<8x128xi1>, vector<8x128xf32>
    %314 = vector.extract_strided_slice %313 {offsets = [0, 0], sizes = [8, 32], strides = [1, 1]} : vector<8x128xf32> to vector<8x32xf32>
    %315 = vector.extract_strided_slice %313 {offsets = [0, 32], sizes = [8, 32], strides = [1, 1]} : vector<8x128xf32> to vector<8x32xf32>
    %316 = vector.extract_strided_slice %313 {offsets = [0, 64], sizes = [8, 32], strides = [1, 1]} : vector<8x128xf32> to vector<8x32xf32>
    %317 = vector.extract_strided_slice %313 {offsets = [0, 96], sizes = [8, 32], strides = [1, 1]} : vector<8x128xf32> to vector<8x32xf32>
    %318 = arith.mulf %315, %279 : vector<8x32xf32>
    %319 = arith.mulf %314, %316 : vector<8x32xf32>
    %320 = arith.addf %318, %319 : vector<8x32xf32>
    %321 = math.tanh %320 : vector<8x32xf32>
    %322 = arith.mulf %317, %321 : vector<8x32xf32>
    %c7_i32_58 = arith.constant 7 : i32
    %323 = tpu.concatenate %303, %322 in 1 : vector<8x32xf32>, vector<8x32xf32> -> vector<8x64xf32>
    %cst_59 = arith.constant dense<0.000000e+00> : vector<8x128xf32>
    %324 = tpu.matmul %323, %8, %cst_59 {dimension_numbers = #tpu.dot_dimension_numbers<[1], [0], [0], [1], [0, 0, 1, 1], [], []>} : vector<8x64xf32>, vector<64x128xf32>, vector<8x128xf32> -> vector<8x128xf32>
    %325 = arith.addf %324, %11 : vector<8x128xf32>
    %326 = math.tanh %325 : vector<8x128xf32>
    %327 = arith.negf %325 : vector<8x128xf32>
    %328 = math.exp %327 : vector<8x128xf32>
    %cst_60 = arith.constant 1.000000e+00 : f32
    %329 = vector.broadcast %cst_60 : f32 to vector<8x128xf32>
    %330 = arith.addf %329, %328 : vector<8x128xf32>
    %331 = arith.divf %329, %330 : vector<8x128xf32>
    %332 = arith.select %17, %326, %331 : vector<8x128xi1>, vector<8x128xf32>
    %333 = vector.extract_strided_slice %332 {offsets = [0, 0], sizes = [8, 32], strides = [1, 1]} : vector<8x128xf32> to vector<8x32xf32>
    %334 = vector.extract_strided_slice %332 {offsets = [0, 32], sizes = [8, 32], strides = [1, 1]} : vector<8x128xf32> to vector<8x32xf32>
    %335 = vector.extract_strided_slice %332 {offsets = [0, 64], sizes = [8, 32], strides = [1, 1]} : vector<8x128xf32> to vector<8x32xf32>
    %336 = vector.extract_strided_slice %332 {offsets = [0, 96], sizes = [8, 32], strides = [1, 1]} : vector<8x128xf32> to vector<8x32xf32>
    %337 = arith.mulf %334, %320 : vector<8x32xf32>
    %338 = arith.mulf %333, %335 : vector<8x32xf32>
    %339 = arith.addf %337, %338 : vector<8x32xf32>
    %340 = math.tanh %339 : vector<8x32xf32>
    %341 = arith.mulf %336, %340 : vector<8x32xf32>
    %c0_61 = arith.constant 0 : index
    %c0_62 = arith.constant 0 : index
    %342 = vector.load %arg6[%c0_61, %c0_62] : memref<32x16xf32, #tpu.memory_space<vmem>>, vector<32x16xf32>
    %cst_63 = arith.constant dense<0.000000e+00> : vector<8x16xf32>
    %343 = tpu.matmul %341, %342, %cst_63 {dimension_numbers = #tpu.dot_dimension_numbers<[1], [0], [0], [1], [0, 0, 1, 1], [], []>} : vector<8x32xf32>, vector<32x16xf32>, vector<8x16xf32> -> vector<8x16xf32>
    %c0_64 = arith.constant 0 : index
    %c0_65 = arith.constant 0 : index
    %344 = vector.load %arg7[%c0_64, %c0_65] : memref<1x16xf32, #tpu.memory_space<vmem>>, vector<1x16xf32>
    %345 = vector.broadcast %344 : vector<1x16xf32> to vector<8x16xf32>
    %346 = arith.addf %343, %345 : vector<8x16xf32>
    %c0_66 = arith.constant 0 : index
    %c0_67 = arith.constant 0 : index
    %347 = vector.load %arg8[%c0_66, %c0_67] : memref<8x16xf32, #tpu.memory_space<vmem>>, vector<8x16xf32>
    tpu.vector_store %arg8[%c0_66, %c0_67], %346 {strides = array<i32>} : memref<8x16xf32, #tpu.memory_space<vmem>>, vector<8x16xf32>,
    return
  }
}

</mosaic_0001>

<llo_original>
// kernel: lstm_model_forward.1
$region0: #{lstm_model_forward.1}
  #allocation0 [shape = 'u32[]', space=smem, size = 0x4, offset = 0x4, fixed_abs, tag = 'smem constant byte address 0x4 - core index']
  #allocation1 [shape = 'u32[72,128]{1,0:T(1,128)}', space=vmem, size = 0x9000, scoped, tag = 'internal scratch']
  #allocation2 [shape = 'f32[64,128]{1,0:T(8,128)}', space=vmem, size = 0x8000, scoped, tag = 'scratch operand']
  %s0 = inlined_call_operand.vmem [shape: f32[64,24], index: 0, kind: input, shape index: {}]
  %s1 = inlined_call_operand.vmem [shape: f32[24,128], index: 1, kind: input, shape index: {}]
  %s2 = inlined_call_operand.vmem [shape: f32[1,128], index: 2, kind: input, shape index: {}]
  %s3 = inlined_call_operand.vmem [shape: f32[32,128], index: 3, kind: input, shape index: {}]
  %s4 = inlined_call_operand.vmem [shape: f32[64,128], index: 4, kind: input, shape index: {}]
  %s5 = inlined_call_operand.vmem [shape: f32[1,128], index: 5, kind: input, shape index: {}]
  %s6 = inlined_call_operand.vmem [shape: f32[32,16], index: 6, kind: input, shape index: {}]
  %s7 = inlined_call_operand.vmem [shape: f32[1,16], index: 7, kind: input, shape index: {}]
  %s8 = inlined_call_operand.vmem [shape: f32[8,16], index: 8, kind: output, shape index: {}]
  %s9 = sld [smem:[#allocation0]]
  $region42: #{lstm_model_forward.1} parent=0
    _
  %s11 = ssub.s32 1, %s9
  %s12 = scalar_select 0, %s11, %s9
  // Predicated region
  $region2: #{lstm_model_forward.1} parent=0 // pred_check
    _
  $region3: #{lstm_model_forward.1} parent=0 // pred_check_branch
    %14 = sbr.rel (0) target = $region5
  $region4: #{lstm_model_forward.1} parent=0 // pred_region
    _
  $region5: #{lstm_model_forward.1} parent=0 // pred_fallthru
    _
  // Predicated region
  $region6: #{lstm_model_forward.1} parent=0 // pred_check
    _
  $region7: #{lstm_model_forward.1} parent=0 // pred_check_branch
    %16 = sbr.rel (0) target = $region9
  $region8: #{lstm_model_forward.1} parent=0 // pred_region
    _
  $region9: #{lstm_model_forward.1} parent=0 // pred_fallthru
    _
  // Predicated region
  $region10: #{lstm_model_forward.1} parent=0 // pred_check
    _
  $region11: #{lstm_model_forward.1} parent=0 // pred_check_branch
    %18 = sbr.rel (0) target = $region13
  $region12: #{lstm_model_forward.1} parent=0 // pred_region
    _
  $region13: #{lstm_model_forward.1} parent=0 // pred_fallthru
    _
  // Predicated region
  $region14: #{lstm_model_forward.1} parent=0 // pred_check
    _
  $region15: #{lstm_model_forward.1} parent=0 // pred_check_branch
    %20 = sbr.rel (0) target = $region17
  $region16: #{lstm_model_forward.1} parent=0 // pred_region
    _
  $region17: #{lstm_model_forward.1} parent=0 // pred_fallthru
    _
  // Predicated region
  $region18: #{lstm_model_forward.1} parent=0 // pred_check
    _
  $region19: #{lstm_model_forward.1} parent=0 // pred_check_branch
    %22 = sbr.rel (0) target = $region21
  $region20: #{lstm_model_forward.1} parent=0 // pred_region
    _
  $region21: #{lstm_model_forward.1} parent=0 // pred_fallthru
    _
  // Predicated region
  $region22: #{lstm_model_forward.1} parent=0 // pred_check
    _
  $region23: #{lstm_model_forward.1} parent=0 // pred_check_branch
    %24 = sbr.rel (0) target = $region25
  $region24: #{lstm_model_forward.1} parent=0 // pred_region
    _
  $region25: #{lstm_model_forward.1} parent=0 // pred_fallthru
    _
  // Predicated region
  $region26: #{lstm_model_forward.1} parent=0 // pred_check
    _
  $region27: #{lstm_model_forward.1} parent=0 // pred_check_branch
    %26 = sbr.rel (0) target = $region29
  $region28: #{lstm_model_forward.1} parent=0 // pred_region
    _
  $region29: #{lstm_model_forward.1} parent=0 // pred_fallthru
    _
  // Predicated region
  $region30: #{lstm_model_forward.1} parent=0 // pred_check
    _
  $region31: #{lstm_model_forward.1} parent=0 // pred_check_branch
    %28 = sbr.rel (0) target = $region33
  $region32: #{lstm_model_forward.1} parent=0 // pred_region
    _
  $region33: #{lstm_model_forward.1} parent=0 // pred_fallthru
    _
  %v29 = vld [vmem:[%s0] sm:$0xff]
  %v30 = vld [vmem:[%s0 + $0x8] sm:$0xff]
  %v31 = vld [vmem:[%s0 + $0x10] sm:$0xff]
  %v32 = vld [vmem:[%s0 + $0x18] sm:$0xff]
  %v33 = vld [vmem:[%s0 + $0x20] sm:$0xff]
  %v34 = vld [vmem:[%s0 + $0x28] sm:$0xff]
  %v35 = vld [vmem:[%s0 + $0x30] sm:$0xff]
  %v36 = vld [vmem:[%s0 + $0x38] sm:$0xff]
  %v37 = vld [vmem:[%s1] sm:$0xff]
  %v38 = vld [vmem:[%s1 + $0x8] sm:$0xff]
  %v39 = vld [vmem:[%s1 + $0x10] sm:$0xff]
  %v40 = vld [vmem:[%s2] sm:$0x1]
  %v42 = vperm.slane %v40, 0
  %vm44 = vcmask 195584
  %v46 = vsel %vm44, %v29, 0
  %v49 = vsel %vm44, %v30, 0
  %v52 = vsel %vm44, %v31, 0
  %v55 = vsel %vm44, %v32, 0
  %v58 = vsel %vm44, %v33, 0
  %v61 = vsel %vm44, %v34, 0
  %v64 = vsel %vm44, %v35, 0
  %v67 = vsel %vm44, %v36, 0
  %69 = vmatpush.msra.mxu0 0.0
  %70 = vmatpush.msra.mxu0 0.0
  %71 = vmatpush.msra.mxu0 0.0
  %72 = vmatpush.msra.mxu0 0.0
  %73 = vmatpush.msra.mxu0 0.0
  %74 = vmatpush.msra.mxu0 0.0
  %75 = vmatpush.msra.mxu0 0.0
  %76 = vmatpush.msra.mxu0 0.0
  %77 = vmatpush.msra.mxu0 0.0
  %78 = vmatpush.msra.mxu0 0.0
  %79 = vmatpush.msra.mxu0 0.0
  %80 = vmatpush.msra.mxu0 0.0
  %81 = vmatpush.msra.mxu0 0.0
  %82 = vmatpush.msra.mxu0 %v39
  %83 = vmatpush.msra.mxu0 %v38
  %84 = vmatpush.msra.mxu0 %v37
  %85 = vmatmul.f32.gmra.mxu0 %v46
  %v86 = vpop.f32.mrf.mxu0
  %v87 = vadd.f32 %v42, %v86
  %88 = vmatmul.f32.gmra.mxu0 %v49
  %v89 = vpop.f32.mrf.mxu0
  %v90 = vadd.f32 %v42, %v89
  %91 = vmatmul.f32.gmra.mxu0 %v52
  %v92 = vpop.f32.mrf.mxu0
  %v93 = vadd.f32 %v42, %v92
  %94 = vmatmul.f32.gmra.mxu0 %v55
  %v95 = vpop.f32.mrf.mxu0
  %v96 = vadd.f32 %v42, %v95
  %97 = vmatmul.f32.gmra.mxu0 %v58
  %v98 = vpop.f32.mrf.mxu0
  %v99 = vadd.f32 %v42, %v98
  %100 = vmatmul.f32.gmra.mxu0 %v61
  %v101 = vpop.f32.mrf.mxu0
  %v102 = vadd.f32 %v42, %v101
  %103 = vmatmul.f32.gmra.mxu0 %v64
  %v104 = vpop.f32.mrf.mxu0
  %v105 = vadd.f32 %v42, %v104
  %106 = vmatmul.f32.gmra.mxu0 %v67
  %v107 = vpop.f32.mrf.mxu0
  %v108 = vadd.f32 %v42, %v107
  %109 = vdwg.mxu0
  %110 = vst [vmem:[#allocation2] sm:$0xff] %v87
  %111 = vst [vmem:[#allocation2 + $0x8] sm:$0xff] %v90
  %112 = vst [vmem:[#allocation2 + $0x10] sm:$0xff] %v93
  %113 = vst [vmem:[#allocation2 + $0x18] sm:$0xff] %v96
  %114 = vst [vmem:[#allocation2 + $0x20] sm:$0xff] %v99
  %115 = vst [vmem:[#allocation2 + $0x28] sm:$0xff] %v102
  %116 = vst [vmem:[#allocation2 + $0x30] sm:$0xff] %v105
  %117 = vst [vmem:[#allocation2 + $0x38] sm:$0xff] %v108
  %v118 = vld [vmem:[%s3] sm:$0xff]
  %v119 = vld [vmem:[%s3 + $0x8] sm:$0xff]
  %v120 = vld [vmem:[%s3 + $0x10] sm:$0xff]
  %v121 = vld [vmem:[%s3 + $0x18] sm:$0xff]
  %v122 = vld [vmem:[%s4] sm:$0xff]
  %v123 = vld [vmem:[%s4 + $0x8] sm:$0xff]
  %v124 = vld [vmem:[%s4 + $0x10] sm:$0xff]
  %v125 = vld [vmem:[%s4 + $0x18] sm:$0xff]
  %v126 = vld [vmem:[%s4 + $0x20] sm:$0xff]
  %v127 = vld [vmem:[%s4 + $0x28] sm:$0xff]
  %v128 = vld [vmem:[%s4 + $0x30] sm:$0xff]
  %v129 = vld [vmem:[%s4 + $0x38] sm:$0xff]
  %v130 = vld [vmem:[%s5] sm:$0x1]
  %v132 = vperm.slane %v130, 0
  %v134 = vlaneseq
  %v135 = vand.u32 %v134, 127
  %vm136 = vcmp.ge.s32.totalorder %v135, 64
  %vm137 = vcmp.lt.s32.totalorder %v135, 96
  %vm138 = vmand %vm136, %vm137
  %v139 = vld [vmem:[#allocation2] sm:$0xff]
  %v140 = vtanh.pop %v139
  %v141 = vxor.u32 %v139, 2147483648
  %v142 = vmul.f32 %v141, 1.442695
  %v143 = vpow.pop %v142
  %v144 = vadd.f32 %v143, 1.0
  %v145 = vrcp.pop %v144
  %v146 = vmul.f32 %v144, %v145
  %v147 = vsub.f32 1.0, %v146
  %v148 = vmul.f32 %v145, %v147
  %v149 = vadd.f32 %v145, %v148
  %vm150 = vweird.f32 %v144
  %vm151 = vweird.f32 %v145
  %vm152 = vmor %vm150, %vm151
  %v153 = vsel %vm152, %v145, %v149
  %v154 = vand.u32 2147483647, %v144
  %vm155 = vcmp.eq.f32.partialorder %v154, 8.507059e+37
  %v156 = vand.u32 %v144, 2147483648
  %v157 = vor.u32 1.1754944e-38, %v156
  %v158 = vsel %vm155, %v157, %v153
  %v159 = vmul.f32 1.0, %v158
  %v160 = vsel %vm138, %v140, %v159
  %v161 = vmul.f32 %v160, 0.0
  %163 = vrot.lane.b32.xlu0 %v160, 64
  %v164 = vpop.permute.xlu0 %163
  %v166 = vmul.f32 %v160, %v164
  %168 = vrot.lane.b32.xlu0 %v166, 32
  %v169 = vpop.permute.xlu0 %168
  %v171 = vadd.f32 %v161, %v169
  %v172 = vtanh.pop %v171
  %174 = vrot.lane.b32.xlu0 %v172, 64
  %v175 = vpop.permute.xlu0 %174
  %v177 = vmul.f32 %v160, %v175
  %s178 = scalar_lea.vmem [#allocation2], 8
  %v179 = vld [vmem:[%s178] sm:$0xff]
  %181 = vrot.lane.b32.xlu0 %v177, 32
  %v182 = vpop.permute.xlu0 %181
  %vm183 = vcmask 261120
  %v184 = vsel %vm183, %v182, 0
  %186 = vmatpush.msra.mxu0 0.0
  %187 = vmatpush.msra.mxu0 0.0
  %188 = vmatpush.msra.mxu0 0.0
  %189 = vmatpush.msra.mxu0 0.0
  %190 = vmatpush.msra.mxu0 0.0
  %191 = vmatpush.msra.mxu0 0.0
  %192 = vmatpush.msra.mxu0 0.0
  %193 = vmatpush.msra.mxu0 0.0
  %194 = vmatpush.msra.mxu0 0.0
  %195 = vmatpush.msra.mxu0 0.0
  %196 = vmatpush.msra.mxu0 0.0
  %197 = vmatpush.msra.mxu0 0.0
  %198 = vmatpush.msra.mxu0 %v121
  %199 = vmatpush.msra.mxu0 %v120
  %200 = vmatpush.msra.mxu0 %v119
  %201 = vmatpush.msra.mxu0 %v118
  %202 = vmatmul.f32.gmra.mxu0 %v184
  %v203 = vpop.f32.mrf.mxu0
  %v204 = vadd.f32 0.0, %v203
  %205 = vdwg.mxu0
  %v206 = vadd.f32 %v179, %v204
  %v207 = vtanh.pop %v206
  %v208 = vxor.u32 %v206, 2147483648
  %v209 = vmul.f32 %v208, 1.442695
  %v210 = vpow.pop %v209
  %v211 = vadd.f32 %v210, 1.0
  %v212 = vrcp.pop %v211
  %v213 = vmul.f32 %v211, %v212
  %v214 = vsub.f32 1.0, %v213
  %v215 = vmul.f32 %v212, %v214
  %v216 = vadd.f32 %v212, %v215
  %vm217 = vweird.f32 %v211
  %vm218 = vweird.f32 %v212
  %vm219 = vmor %vm217, %vm218
  %v220 = vsel %vm219, %v212, %v216
  %v221 = vand.u32 2147483647, %v211
  %vm222 = vcmp.eq.f32.partialorder %v221, 8.507059e+37
  %v223 = vand.u32 %v211, 2147483648
  %v224 = vor.u32 1.1754944e-38, %v223
  %v225 = vsel %vm222, %v224, %v220
  %v226 = vmul.f32 1.0, %v225
  %v227 = vsel %vm138, %v207, %v226
  %v228 = vmul.f32 %v227, %v171
  %230 = vrot.lane.b32.xlu0 %v227, 64
  %v231 = vpop.permute.xlu0 %230
  %v233 = vmul.f32 %v227, %v231
  %235 = vrot.lane.b32.xlu0 %v233, 32
  %v236 = vpop.permute.xlu0 %235
  %v238 = vadd.f32 %v228, %v236
  %v239 = vtanh.pop %v238
  %241 = vrot.lane.b32.xlu0 %v239, 64
  %v242 = vpop.permute.xlu0 %241
  %v244 = vmul.f32 %v227, %v242
  %v246 = vsel %vm183, %v182, 0.0
  %vm247 = vcmask 523264
  %v249 = vsel %vm247, %v246, 0
  %251 = vmatpush.msra.mxu0 0.0
  %252 = vmatpush.msra.mxu0 0.0
  %253 = vmatpush.msra.mxu0 0.0
  %254 = vmatpush.msra.mxu0 0.0
  %255 = vmatpush.msra.mxu0 0.0
  %256 = vmatpush.msra.mxu0 0.0
  %257 = vmatpush.msra.mxu0 0.0
  %258 = vmatpush.msra.mxu0 0.0
  %259 = vmatpush.msra.mxu0 %v129
  %260 = vmatpush.msra.mxu0 %v128
  %261 = vmatpush.msra.mxu0 %v127
  %262 = vmatpush.msra.mxu0 %v126
  %263 = vmatpush.msra.mxu0 %v125
  %264 = vmatpush.msra.mxu0 %v124
  %265 = vmatpush.msra.mxu0 %v123
  %266 = vmatpush.msra.mxu0 %v122
  %267 = vmatmul.f32.gmra.mxu0 %v249
  %v268 = vpop.f32.mrf.mxu0
  %v269 = vadd.f32 %v132, %v268
  %270 = vdwg.mxu0
  %v271 = vtanh.pop %v269
  %v272 = vxor.u32 %v269, 2147483648
  %v273 = vmul.f32 %v272, 1.442695
  %v274 = vpow.pop %v273
  %v275 = vadd.f32 %v274, 1.0
  %v276 = vrcp.pop %v275
  %v277 = vmul.f32 %v275, %v276
  %v278 = vsub.f32 1.0, %v277
  %v279 = vmul.f32 %v276, %v278
  %v280 = vadd.f32 %v276, %v279
  %vm281 = vweird.f32 %v275
  %vm282 = vweird.f32 %v276
  %vm283 = vmor %vm281, %vm282
  %v284 = vsel %vm283, %v276, %v280
  %v285 = vand.u32 2147483647, %v275
  %vm286 = vcmp.eq.f32.partialorder %v285, 8.507059e+37
  %v287 = vand.u32 %v275, 2147483648
  %v288 = vor.u32 1.1754944e-38, %v287
  %v289 = vsel %vm286, %v288, %v284
  %v290 = vmul.f32 1.0, %v289
  %v291 = vsel %vm138, %v271, %v290
  %v292 = vmul.f32 %v291, 0.0
  %294 = vrot.lane.b32.xlu0 %v291, 64
  %v295 = vpop.permute.xlu0 %294
  %v297 = vmul.f32 %v291, %v295
  %299 = vrot.lane.b32.xlu0 %v297, 32
  %v300 = vpop.permute.xlu0 %299
  %v302 = vadd.f32 %v292, %v300
  %v303 = vtanh.pop %v302
  %305 = vrot.lane.b32.xlu0 %v303, 64
  %v306 = vpop.permute.xlu0 %305
  %v308 = vmul.f32 %v291, %v306
  %s309 = scalar_lea.vmem [#allocation2], 16
  %v310 = vld [vmem:[%s309] sm:$0xff]
  %312 = vrot.lane.b32.xlu0 %v244, 32
  %v313 = vpop.permute.xlu0 %312
  %v314 = vsel %vm183, %v313, 0
  %316 = vmatpush.msra.mxu0 0.0
  %317 = vmatpush.msra.mxu0 0.0
  %318 = vmatpush.msra.mxu0 0.0
  %319 = vmatpush.msra.mxu0 0.0
  %320 = vmatpush.msra.mxu0 0.0
  %321 = vmatpush.msra.mxu0 0.0
  %322 = vmatpush.msra.mxu0 0.0
  %323 = vmatpush.msra.mxu0 0.0
  %324 = vmatpush.msra.mxu0 0.0
  %325 = vmatpush.msra.mxu0 0.0
  %326 = vmatpush.msra.mxu0 0.0
  %327 = vmatpush.msra.mxu0 0.0
  %328 = vmatpush.msra.mxu0 %v121
  %329 = vmatpush.msra.mxu0 %v120
  %330 = vmatpush.msra.mxu0 %v119
  %331 = vmatpush.msra.mxu0 %v118
  %332 = vmatmul.f32.gmra.mxu0 %v314
  %v333 = vpop.f32.mrf.mxu0
  %v334 = vadd.f32 0.0, %v333
  %335 = vdwg.mxu0
  %v336 = vadd.f32 %v310, %v334
  %v337 = vtanh.pop %v336
  %v338 = vxor.u32 %v336, 2147483648
  %v339 = vmul.f32 %v338, 1.442695
  %v340 = vpow.pop %v339
  %v341 = vadd.f32 %v340, 1.0
  %v342 = vrcp.pop %v341
  %v343 = vmul.f32 %v341, %v342
  %v344 = vsub.f32 1.0, %v343
  %v345 = vmul.f32 %v342, %v344
  %v346 = vadd.f32 %v342, %v345
  %vm347 = vweird.f32 %v341
  %vm348 = vweird.f32 %v342
  %vm349 = vmor %vm347, %vm348
  %v350 = vsel %vm349, %v342, %v346
  %v351 = vand.u32 2147483647, %v341
  %vm352 = vcmp.eq.f32.partialorder %v351, 8.507059e+37
  %v353 = vand.u32 %v341, 2147483648
  %v354 = vor.u32 1.1754944e-38, %v353
  %v355 = vsel %vm352, %v354, %v350
  %v356 = vmul.f32 1.0, %v355
  %v357 = vsel %vm138, %v337, %v356
  %v358 = vmul.f32 %v357, %v238
  %360 = vrot.lane.b32.xlu0 %v357, 64
  %v361 = vpop.permute.xlu0 %360
  %v363 = vmul.f32 %v357, %v361
  %365 = vrot.lane.b32.xlu0 %v363, 32
  %v366 = vpop.permute.xlu0 %365
  %v368 = vadd.f32 %v358, %v366
  %v369 = vtanh.pop %v368
  %371 = vrot.lane.b32.xlu0 %v369, 64
  %v372 = vpop.permute.xlu0 %371
  %v374 = vmul.f32 %v357, %v372
  %377 = vrot.lane.b32.xlu0 %v308, 64
  %v378 = vpop.permute.xlu0 %377
  %v380 = vsel %vm183, %v313, %v378
  %v382 = vsel %vm247, %v380, 0
  %384 = vmatpush.msra.mxu0 0.0
  %385 = vmatpush.msra.mxu0 0.0
  %386 = vmatpush.msra.mxu0 0.0
  %387 = vmatpush.msra.mxu0 0.0
  %388 = vmatpush.msra.mxu0 0.0
  %389 = vmatpush.msra.mxu0 0.0
  %390 = vmatpush.msra.mxu0 0.0
  %391 = vmatpush.msra.mxu0 0.0
  %392 = vmatpush.msra.mxu0 %v129
  %393 = vmatpush.msra.mxu0 %v128
  %394 = vmatpush.msra.mxu0 %v127
  %395 = vmatpush.msra.mxu0 %v126
  %396 = vmatpush.msra.mxu0 %v125
  %397 = vmatpush.msra.mxu0 %v124
  %398 = vmatpush.msra.mxu0 %v123
  %399 = vmatpush.msra.mxu0 %v122
  %400 = vmatmul.f32.gmra.mxu0 %v382
  %v401 = vpop.f32.mrf.mxu0
  %v402 = vadd.f32 %v132, %v401
  %403 = vdwg.mxu0
  %v404 = vtanh.pop %v402
  %v405 = vxor.u32 %v402, 2147483648
  %v406 = vmul.f32 %v405, 1.442695
  %v407 = vpow.pop %v406
  %v408 = vadd.f32 %v407, 1.0
  %v409 = vrcp.pop %v408
  %v410 = vmul.f32 %v408, %v409
  %v411 = vsub.f32 1.0, %v410
  %v412 = vmul.f32 %v409, %v411
  %v413 = vadd.f32 %v409, %v412
  %vm414 = vweird.f32 %v408
  %vm415 = vweird.f32 %v409
  %vm416 = vmor %vm414, %vm415
  %v417 = vsel %vm416, %v409, %v413
  %v418 = vand.u32 2147483647, %v408
  %vm419 = vcmp.eq.f32.partialorder %v418, 8.507059e+37
  %v420 = vand.u32 %v408, 2147483648
  %v421 = vor.u32 1.1754944e-38, %v420
  %v422 = vsel %vm419, %v421, %v417
  %v423 = vmul.f32 1.0, %v422
  %v424 = vsel %vm138, %v404, %v423
  %v425 = vmul.f32 %v424, %v302
  %427 = vrot.lane.b32.xlu0 %v424, 64
  %v428 = vpop.permute.xlu0 %427
  %v430 = vmul.f32 %v424, %v428
  %432 = vrot.lane.b32.xlu0 %v430, 32
  %v433 = vpop.permute.xlu0 %432
  %v435 = vadd.f32 %v425, %v433
  %v436 = vtanh.pop %v435
  %438 = vrot.lane.b32.xlu0 %v436, 64
  %v439 = vpop.permute.xlu0 %438
  %v441 = vmul.f32 %v424, %v439
  %s442 = scalar_lea.vmem [#allocation2], 24
  %v443 = vld [vmem:[%s442] sm:$0xff]
  %445 = vrot.lane.b32.xlu0 %v374, 32
  %v446 = vpop.permute.xlu0 %445
  %v447 = vsel %vm183, %v446, 0
  %449 = vmatpush.msra.mxu0 0.0
  %450 = vmatpush.msra.mxu0 0.0
  %451 = vmatpush.msra.mxu0 0.0
  %452 = vmatpush.msra.mxu0 0.0
  %453 = vmatpush.msra.mxu0 0.0
  %454 = vmatpush.msra.mxu0 0.0
  %455 = vmatpush.msra.mxu0 0.0
  %456 = vmatpush.msra.mxu0 0.0
  %457 = vmatpush.msra.mxu0 0.0
  %458 = vmatpush.msra.mxu0 0.0
  %459 = vmatpush.msra.mxu0 0.0
  %460 = vmatpush.msra.mxu0 0.0
  %461 = vmatpush.msra.mxu0 %v121
  %462 = vmatpush.msra.mxu0 %v120
  %463 = vmatpush.msra.mxu0 %v119
  %464 = vmatpush.msra.mxu0 %v118
  %465 = vmatmul.f32.gmra.mxu0 %v447
  %v466 = vpop.f32.mrf.mxu0
  %v467 = vadd.f32 0.0, %v466
  %468 = vdwg.mxu0
  %v469 = vadd.f32 %v443, %v467
  %v470 = vtanh.pop %v469
  %v471 = vxor.u32 %v469, 2147483648
  %v472 = vmul.f32 %v471, 1.442695
  %v473 = vpow.pop %v472
  %v474 = vadd.f32 %v473, 1.0
  %v475 = vrcp.pop %v474
  %v476 = vmul.f32 %v474, %v475
  %v477 = vsub.f32 1.0, %v476
  %v478 = vmul.f32 %v475, %v477
  %v479 = vadd.f32 %v475, %v478
  %vm480 = vweird.f32 %v474
  %vm481 = vweird.f32 %v475
  %vm482 = vmor %vm480, %vm481
  %v483 = vsel %vm482, %v475, %v479
  %v484 = vand.u32 2147483647, %v474
  %vm485 = vcmp.eq.f32.partialorder %v484, 8.507059e+37
  %v486 = vand.u32 %v474, 2147483648
  %v487 = vor.u32 1.1754944e-38, %v486
  %v488 = vsel %vm485, %v487, %v483
  %v489 = vmul.f32 1.0, %v488
  %v490 = vsel %vm138, %v470, %v489
  %v491 = vmul.f32 %v490, %v368
  %493 = vrot.lane.b32.xlu0 %v490, 64
  %v494 = vpop.permute.xlu0 %493
  %v496 = vmul.f32 %v490, %v494
  %498 = vrot.lane.b32.xlu0 %v496, 32
  %v499 = vpop.permute.xlu0 %498
  %v501 = vadd.f32 %v491, %v499
  %v502 = vtanh.pop %v501
  %504 = vrot.lane.b32.xlu0 %v502, 64
  %v505 = vpop.permute.xlu0 %504
  %v507 = vmul.f32 %v490, %v505
  %510 = vrot.lane.b32.xlu0 %v441, 64
  %v511 = vpop.permute.xlu0 %510
  %v513 = vsel %vm183, %v446, %v511
  %v515 = vsel %vm247, %v513, 0
  %517 = vmatpush.msra.mxu0 0.0
  %518 = vmatpush.msra.mxu0 0.0
  %519 = vmatpush.msra.mxu0 0.0
  %520 = vmatpush.msra.mxu0 0.0
  %521 = vmatpush.msra.mxu0 0.0
  %522 = vmatpush.msra.mxu0 0.0
  %523 = vmatpush.msra.mxu0 0.0
  %524 = vmatpush.msra.mxu0 0.0
  %525 = vmatpush.msra.mxu0 %v129
  %526 = vmatpush.msra.mxu0 %v128
  %527 = vmatpush.msra.mxu0 %v127
  %528 = vmatpush.msra.mxu0 %v126
  %529 = vmatpush.msra.mxu0 %v125
  %530 = vmatpush.msra.mxu0 %v124
  %531 = vmatpush.msra.mxu0 %v123
  %532 = vmatpush.msra.mxu0 %v122
  %533 = vmatmul.f32.gmra.mxu0 %v515
  %v534 = vpop.f32.mrf.mxu0
  %v535 = vadd.f32 %v132, %v534
  %536 = vdwg.mxu0
  %v537 = vtanh.pop %v535
  %v538 = vxor.u32 %v535, 2147483648
  %v539 = vmul.f32 %v538, 1.442695
  %v540 = vpow.pop %v539
  %v541 = vadd.f32 %v540, 1.0
  %v542 = vrcp.pop %v541
  %v543 = vmul.f32 %v541, %v542
  %v544 = vsub.f32 1.0, %v543
  %v545 = vmul.f32 %v542, %v544
  %v546 = vadd.f32 %v542, %v545
  %vm547 = vweird.f32 %v541
  %vm548 = vweird.f32 %v542
  %vm549 = vmor %vm547, %vm548
  %v550 = vsel %vm549, %v542, %v546
  %v551 = vand.u32 2147483647, %v541
  %vm552 = vcmp.eq.f32.partialorder %v551, 8.507059e+37
  %v553 = vand.u32 %v541, 2147483648
  %v554 = vor.u32 1.1754944e-38, %v553
  %v555 = vsel %vm552, %v554, %v550
  %v556 = vmul.f32 1.0, %v555
  %v557 = vsel %vm138, %v537, %v556
  %v558 = vmul.f32 %v557, %v435
  %560 = vrot.lane.b32.xlu0 %v557, 64
  %v561 = vpop.permute.xlu0 %560
  %v563 = vmul.f32 %v557, %v561
  %565 = vrot.lane.b32.xlu0 %v563, 32
  %v566 = vpop.permute.xlu0 %565
  %v568 = vadd.f32 %v558, %v566
  %v569 = vtanh.pop %v568
  %571 = vrot.lane.b32.xlu0 %v569, 64
  %v572 = vpop.permute.xlu0 %571
  %v574 = vmul.f32 %v557, %v572
  %s575 = scalar_lea.vmem [#allocation2], 32
  %v576 = vld [vmem:[%s575] sm:$0xff]
  %578 = vrot.lane.b32.xlu0 %v507, 32
  %v579 = vpop.permute.xlu0 %578
  %v580 = vsel %vm183, %v579, 0
  %582 = vmatpush.msra.mxu0 0.0
  %583 = vmatpush.msra.mxu0 0.0
  %584 = vmatpush.msra.mxu0 0.0
  %585 = vmatpush.msra.mxu0 0.0
  %586 = vmatpush.msra.mxu0 0.0
  %587 = vmatpush.msra.mxu0 0.0
  %588 = vmatpush.msra.mxu0 0.0
  %589 = vmatpush.msra.mxu0 0.0
  %590 = vmatpush.msra.mxu0 0.0
  %591 = vmatpush.msra.mxu0 0.0
  %592 = vmatpush.msra.mxu0 0.0
  %593 = vmatpush.msra.mxu0 0.0
  %594 = vmatpush.msra.mxu0 %v121
  %595 = vmatpush.msra.mxu0 %v120
  %596 = vmatpush.msra.mxu0 %v119
  %597 = vmatpush.msra.mxu0 %v118
  %598 = vmatmul.f32.gmra.mxu0 %v580
  %v599 = vpop.f32.mrf.mxu0
  %v600 = vadd.f32 0.0, %v599
  %601 = vdwg.mxu0
  %v602 = vadd.f32 %v576, %v600
  %v603 = vtanh.pop %v602
  %v604 = vxor.u32 %v602, 2147483648
  %v605 = vmul.f32 %v604, 1.442695
  %v606 = vpow.pop %v605
  %v607 = vadd.f32 %v606, 1.0
  %v608 = vrcp.pop %v607
  %v609 = vmul.f32 %v607, %v608
  %v610 = vsub.f32 1.0, %v609
  %v611 = vmul.f32 %v608, %v610
  %v612 = vadd.f32 %v608, %v611
  %vm613 = vweird.f32 %v607
  %vm614 = vweird.f32 %v608
  %vm615 = vmor %vm613, %vm614
  %v616 = vsel %vm615, %v608, %v612
  %v617 = vand.u32 2147483647, %v607
  %vm618 = vcmp.eq.f32.partialorder %v617, 8.507059e+37
  %v619 = vand.u32 %v607, 2147483648
  %v620 = vor.u32 1.1754944e-38, %v619
  %v621 = vsel %vm618, %v620, %v616
  %v622 = vmul.f32 1.0, %v621
  %v623 = vsel %vm138, %v603, %v622
  %v624 = vmul.f32 %v623, %v501
  %626 = vrot.lane.b32.xlu0 %v623, 64
  %v627 = vpop.permute.xlu0 %626
  %v629 = vmul.f32 %v623, %v627
  %631 = vrot.lane.b32.xlu0 %v629, 32
  %v632 = vpop.permute.xlu0 %631
  %v634 = vadd.f32 %v624, %v632
  %v635 = vtanh.pop %v634
  %637 = vrot.lane.b32.xlu0 %v635, 64
  %v638 = vpop.permute.xlu0 %637
  %v640 = vmul.f32 %v623, %v638
  %643 = vrot.lane.b32.xlu0 %v574, 64
  %v644 = vpop.permute.xlu0 %643
  %v646 = vsel %vm183, %v579, %v644
  %v648 = vsel %vm247, %v646, 0
  %650 = vmatpush.msra.mxu0 0.0
  %651 = vmatpush.msra.mxu0 0.0
  %652 = vmatpush.msra.mxu0 0.0
  %653 = vmatpush.msra.mxu0 0.0
  %654 = vmatpush.msra.mxu0 0.0
  %655 = vmatpush.msra.mxu0 0.0
  %656 = vmatpush.msra.mxu0 0.0
  %657 = vmatpush.msra.mxu0 0.0
  %658 = vmatpush.msra.mxu0 %v129
  %659 = vmatpush.msra.mxu0 %v128
  %660 = vmatpush.msra.mxu0 %v127
  %661 = vmatpush.msra.mxu0 %v126
  %662 = vmatpush.msra.mxu0 %v125
  %663 = vmatpush.msra.mxu0 %v124
  %664 = vmatpush.msra.mxu0 %v123
  %665 = vmatpush.msra.mxu0 %v122
  %666 = vmatmul.f32.gmra.mxu0 %v648
  %v667 = vpop.f32.mrf.mxu0
  %v668 = vadd.f32 %v132, %v667
  %669 = vdwg.mxu0
  %v670 = vtanh.pop %v668
  %v671 = vxor.u32 %v668, 2147483648
  %v672 = vmul.f32 %v671, 1.442695
  %v673 = vpow.pop %v672
  %v674 = vadd.f32 %v673, 1.0
  %v675 = vrcp.pop %v674
  %v676 = vmul.f32 %v674, %v675
  %v677 = vsub.f32 1.0, %v676
  %v678 = vmul.f32 %v675, %v677
  %v679 = vadd.f32 %v675, %v678
  %vm680 = vweird.f32 %v674
  %vm681 = vweird.f32 %v675
  %vm682 = vmor %vm680, %vm681
  %v683 = vsel %vm682, %v675, %v679
  %v684 = vand.u32 2147483647, %v674
  %vm685 = vcmp.eq.f32.partialorder %v684, 8.507059e+37
  %v686 = vand.u32 %v674, 2147483648
  %v687 = vor.u32 1.1754944e-38, %v686
  %v688 = vsel %vm685, %v687, %v683
  %v689 = vmul.f32 1.0, %v688
  %v690 = vsel %vm138, %v670, %v689
  %v691 = vmul.f32 %v690, %v568
  %693 = vrot.lane.b32.xlu0 %v690, 64
  %v694 = vpop.permute.xlu0 %693
  %v696 = vmul.f32 %v690, %v694
  %698 = vrot.lane.b32.xlu0 %v696, 32
  %v699 = vpop.permute.xlu0 %698
  %v701 = vadd.f32 %v691, %v699
  %v702 = vtanh.pop %v701
  %704 = vrot.lane.b32.xlu0 %v702, 64
  %v705 = vpop.permute.xlu0 %704
  %v707 = vmul.f32 %v690, %v705
  %s708 = scalar_lea.vmem [#allocation2], 40
  %v709 = vld [vmem:[%s708] sm:$0xff]
  %711 = vrot.lane.b32.xlu0 %v640, 32
  %v712 = vpop.permute.xlu0 %711
  %v713 = vsel %vm183, %v712, 0
  %715 = vmatpush.msra.mxu0 0.0
  %716 = vmatpush.msra.mxu0 0.0
  %717 = vmatpush.msra.mxu0 0.0
  %718 = vmatpush.msra.mxu0 0.0
  %719 = vmatpush.msra.mxu0 0.0
  %720 = vmatpush.msra.mxu0 0.0
  %721 = vmatpush.msra.mxu0 0.0
  %722 = vmatpush.msra.mxu0 0.0
  %723 = vmatpush.msra.mxu0 0.0
  %724 = vmatpush.msra.mxu0 0.0
  %725 = vmatpush.msra.mxu0 0.0
  %726 = vmatpush.msra.mxu0 0.0
  %727 = vmatpush.msra.mxu0 %v121
  %728 = vmatpush.msra.mxu0 %v120
  %729 = vmatpush.msra.mxu0 %v119
  %730 = vmatpush.msra.mxu0 %v118
  %731 = vmatmul.f32.gmra.mxu0 %v713
  %v732 = vpop.f32.mrf.mxu0
  %v733 = vadd.f32 0.0, %v732
  %734 = vdwg.mxu0
  %v735 = vadd.f32 %v709, %v733
  %v736 = vtanh.pop %v735
  %v737 = vxor.u32 %v735, 2147483648
  %v738 = vmul.f32 %v737, 1.442695
  %v739 = vpow.pop %v738
  %v740 = vadd.f32 %v739, 1.0
  %v741 = vrcp.pop %v740
  %v742 = vmul.f32 %v740, %v741
  %v743 = vsub.f32 1.0, %v742
  %v744 = vmul.f32 %v741, %v743
  %v745 = vadd.f32 %v741, %v744
  %vm746 = vweird.f32 %v740
  %vm747 = vweird.f32 %v741
  %vm748 = vmor %vm746, %vm747
  %v749 = vsel %vm748, %v741, %v745
  %v750 = vand.u32 2147483647, %v740
  %vm751 = vcmp.eq.f32.partialorder %v750, 8.507059e+37
  %v752 = vand.u32 %v740, 2147483648
  %v753 = vor.u32 1.1754944e-38, %v752
  %v754 = vsel %vm751, %v753, %v749
  %v755 = vmul.f32 1.0, %v754
  %v756 = vsel %vm138, %v736, %v755
  %v757 = vmul.f32 %v756, %v634
  %759 = vrot.lane.b32.xlu0 %v756, 64
  %v760 = vpop.permute.xlu0 %759
  %v762 = vmul.f32 %v756, %v760
  %764 = vrot.lane.b32.xlu0 %v762, 32
  %v765 = vpop.permute.xlu0 %764
  %v767 = vadd.f32 %v757, %v765
  %v768 = vtanh.pop %v767
  %770 = vrot.lane.b32.xlu0 %v768, 64
  %v771 = vpop.permute.xlu0 %770
  %v773 = vmul.f32 %v756, %v771
  %776 = vrot.lane.b32.xlu0 %v707, 64
  %v777 = vpop.permute.xlu0 %776
  %v779 = vsel %vm183, %v712, %v777
  %v781 = vsel %vm247, %v779, 0
  %783 = vmatpush.msra.mxu0 0.0
  %784 = vmatpush.msra.mxu0 0.0
  %785 = vmatpush.msra.mxu0 0.0
  %786 = vmatpush.msra.mxu0 0.0
  %787 = vmatpush.msra.mxu0 0.0
  %788 = vmatpush.msra.mxu0 0.0
  %789 = vmatpush.msra.mxu0 0.0
  %790 = vmatpush.msra.mxu0 0.0
  %791 = vmatpush.msra.mxu0 %v129
  %792 = vmatpush.msra.mxu0 %v128
  %793 = vmatpush.msra.mxu0 %v127
  %794 = vmatpush.msra.mxu0 %v126
  %795 = vmatpush.msra.mxu0 %v125
  %796 = vmatpush.msra.mxu0 %v124
  %797 = vmatpush.msra.mxu0 %v123
  %798 = vmatpush.msra.mxu0 %v122
  %799 = vmatmul.f32.gmra.mxu0 %v781
  %v800 = vpop.f32.mrf.mxu0
  %v801 = vadd.f32 %v132, %v800
  %802 = vdwg.mxu0
  %v803 = vtanh.pop %v801
  %v804 = vxor.u32 %v801, 2147483648
  %v805 = vmul.f32 %v804, 1.442695
  %v806 = vpow.pop %v805
  %v807 = vadd.f32 %v806, 1.0
  %v808 = vrcp.pop %v807
  %v809 = vmul.f32 %v807, %v808
  %v810 = vsub.f32 1.0, %v809
  %v811 = vmul.f32 %v808, %v810
  %v812 = vadd.f32 %v808, %v811
  %vm813 = vweird.f32 %v807
  %vm814 = vweird.f32 %v808
  %vm815 = vmor %vm813, %vm814
  %v816 = vsel %vm815, %v808, %v812
  %v817 = vand.u32 2147483647, %v807
  %vm818 = vcmp.eq.f32.partialorder %v817, 8.507059e+37
  %v819 = vand.u32 %v807, 2147483648
  %v820 = vor.u32 1.1754944e-38, %v819
  %v821 = vsel %vm818, %v820, %v816
  %v822 = vmul.f32 1.0, %v821
  %v823 = vsel %vm138, %v803, %v822
  %v824 = vmul.f32 %v823, %v701
  %826 = vrot.lane.b32.xlu0 %v823, 64
  %v827 = vpop.permute.xlu0 %826
  %v829 = vmul.f32 %v823, %v827
  %831 = vrot.lane.b32.xlu0 %v829, 32
  %v832 = vpop.permute.xlu0 %831
  %v834 = vadd.f32 %v824, %v832
  %v835 = vtanh.pop %v834
  %837 = vrot.lane.b32.xlu0 %v835, 64
  %v838 = vpop.permute.xlu0 %837
  %v840 = vmul.f32 %v823, %v838
  %s841 = scalar_lea.vmem [#allocation2], 48
  %v842 = vld [vmem:[%s841] sm:$0xff]
  %844 = vrot.lane.b32.xlu0 %v773, 32
  %v845 = vpop.permute.xlu0 %844
  %v846 = vsel %vm183, %v845, 0
  %848 = vmatpush.msra.mxu0 0.0
  %849 = vmatpush.msra.mxu0 0.0
  %850 = vmatpush.msra.mxu0 0.0
  %851 = vmatpush.msra.mxu0 0.0
  %852 = vmatpush.msra.mxu0 0.0
  %853 = vmatpush.msra.mxu0 0.0
  %854 = vmatpush.msra.mxu0 0.0
  %855 = vmatpush.msra.mxu0 0.0
  %856 = vmatpush.msra.mxu0 0.0
  %857 = vmatpush.msra.mxu0 0.0
  %858 = vmatpush.msra.mxu0 0.0
  %859 = vmatpush.msra.mxu0 0.0
  %860 = vmatpush.msra.mxu0 %v121
  %861 = vmatpush.msra.mxu0 %v120
  %862 = vmatpush.msra.mxu0 %v119
  %863 = vmatpush.msra.mxu0 %v118
  %864 = vmatmul.f32.gmra.mxu0 %v846
  %v865 = vpop.f32.mrf.mxu0
  %v866 = vadd.f32 0.0, %v865
  %867 = vdwg.mxu0
  %v868 = vadd.f32 %v842, %v866
  %v869 = vtanh.pop %v868
  %v870 = vxor.u32 %v868, 2147483648
  %v871 = vmul.f32 %v870, 1.442695
  %v872 = vpow.pop %v871
  %v873 = vadd.f32 %v872, 1.0
  %v874 = vrcp.pop %v873
  %v875 = vmul.f32 %v873, %v874
  %v876 = vsub.f32 1.0, %v875
  %v877 = vmul.f32 %v874, %v876
  %v878 = vadd.f32 %v874, %v877
  %vm879 = vweird.f32 %v873
  %vm880 = vweird.f32 %v874
  %vm881 = vmor %vm879, %vm880
  %v882 = vsel %vm881, %v874, %v878
  %v883 = vand.u32 2147483647, %v873
  %vm884 = vcmp.eq.f32.partialorder %v883, 8.507059e+37
  %v885 = vand.u32 %v873, 2147483648
  %v886 = vor.u32 1.1754944e-38, %v885
  %v887 = vsel %vm884, %v886, %v882
  %v888 = vmul.f32 1.0, %v887
  %v889 = vsel %vm138, %v869, %v888
  %v890 = vmul.f32 %v889, %v767
  %892 = vrot.lane.b32.xlu0 %v889, 64
  %v893 = vpop.permute.xlu0 %892
  %v895 = vmul.f32 %v889, %v893
  %897 = vrot.lane.b32.xlu0 %v895, 32
  %v898 = vpop.permute.xlu0 %897
  %v900 = vadd.f32 %v890, %v898
  %v901 = vtanh.pop %v900
  %903 = vrot.lane.b32.xlu0 %v901, 64
  %v904 = vpop.permute.xlu0 %903
  %v906 = vmul.f32 %v889, %v904
  %909 = vrot.lane.b32.xlu0 %v840, 64
  %v910 = vpop.permute.xlu0 %909
  %v912 = vsel %vm183, %v845, %v910
  %v914 = vsel %vm247, %v912, 0
  %916 = vmatpush.msra.mxu0 0.0
  %917 = vmatpush.msra.mxu0 0.0
  %918 = vmatpush.msra.mxu0 0.0
  %919 = vmatpush.msra.mxu0 0.0
  %920 = vmatpush.msra.mxu0 0.0
  %921 = vmatpush.msra.mxu0 0.0
  %922 = vmatpush.msra.mxu0 0.0
  %923 = vmatpush.msra.mxu0 0.0
  %924 = vmatpush.msra.mxu0 %v129
  %925 = vmatpush.msra.mxu0 %v128
  %926 = vmatpush.msra.mxu0 %v127
  %927 = vmatpush.msra.mxu0 %v126
  %928 = vmatpush.msra.mxu0 %v125
  %929 = vmatpush.msra.mxu0 %v124
  %930 = vmatpush.msra.mxu0 %v123
  %931 = vmatpush.msra.mxu0 %v122
  %932 = vmatmul.f32.gmra.mxu0 %v914
  %v933 = vpop.f32.mrf.mxu0
  %v934 = vadd.f32 %v132, %v933
  %935 = vdwg.mxu0
  %v936 = vtanh.pop %v934
  %v937 = vxor.u32 %v934, 2147483648
  %v938 = vmul.f32 %v937, 1.442695
  %v939 = vpow.pop %v938
  %v940 = vadd.f32 %v939, 1.0
  %v941 = vrcp.pop %v940
  %v942 = vmul.f32 %v940, %v941
  %v943 = vsub.f32 1.0, %v942
  %v944 = vmul.f32 %v941, %v943
  %v945 = vadd.f32 %v941, %v944
  %vm946 = vweird.f32 %v940
  %vm947 = vweird.f32 %v941
  %vm948 = vmor %vm946, %vm947
  %v949 = vsel %vm948, %v941, %v945
  %v950 = vand.u32 2147483647, %v940
  %vm951 = vcmp.eq.f32.partialorder %v950, 8.507059e+37
  %v952 = vand.u32 %v940, 2147483648
  %v953 = vor.u32 1.1754944e-38, %v952
  %v954 = vsel %vm951, %v953, %v949
  %v955 = vmul.f32 1.0, %v954
  %v956 = vsel %vm138, %v936, %v955
  %v957 = vmul.f32 %v956, %v834
  %959 = vrot.lane.b32.xlu0 %v956, 64
  %v960 = vpop.permute.xlu0 %959
  %v962 = vmul.f32 %v956, %v960
  %964 = vrot.lane.b32.xlu0 %v962, 32
  %v965 = vpop.permute.xlu0 %964
  %v967 = vadd.f32 %v957, %v965
  %v968 = vtanh.pop %v967
  %970 = vrot.lane.b32.xlu0 %v968, 64
  %v971 = vpop.permute.xlu0 %970
  %v973 = vmul.f32 %v956, %v971
  %s974 = scalar_lea.vmem [#allocation2], 56
  %v975 = vld [vmem:[%s974] sm:$0xff]
  %977 = vrot.lane.b32.xlu0 %v906, 32
  %v978 = vpop.permute.xlu0 %977
  %v979 = vsel %vm183, %v978, 0
  %981 = vmatpush.msra.mxu0 0.0
  %982 = vmatpush.msra.mxu0 0.0
  %983 = vmatpush.msra.mxu0 0.0
  %984 = vmatpush.msra.mxu0 0.0
  %985 = vmatpush.msra.mxu0 0.0
  %986 = vmatpush.msra.mxu0 0.0
  %987 = vmatpush.msra.mxu0 0.0
  %988 = vmatpush.msra.mxu0 0.0
  %989 = vmatpush.msra.mxu0 0.0
  %990 = vmatpush.msra.mxu0 0.0
  %991 = vmatpush.msra.mxu0 0.0
  %992 = vmatpush.msra.mxu0 0.0
  %993 = vmatpush.msra.mxu0 %v121
  %994 = vmatpush.msra.mxu0 %v120
  %995 = vmatpush.msra.mxu0 %v119
  %996 = vmatpush.msra.mxu0 %v118
  %997 = vmatmul.f32.gmra.mxu0 %v979
  %v998 = vpop.f32.mrf.mxu0
  %v999 = vadd.f32 0.0, %v998
  %1000 = vdwg.mxu0
  %v1001 = vadd.f32 %v975, %v999
  %v1002 = vtanh.pop %v1001
  %v1003 = vxor.u32 %v1001, 2147483648
  %v1004 = vmul.f32 %v1003, 1.442695
  %v1005 = vpow.pop %v1004
  %v1006 = vadd.f32 %v1005, 1.0
  %v1007 = vrcp.pop %v1006
  %v1008 = vmul.f32 %v1006, %v1007
  %v1009 = vsub.f32 1.0, %v1008
  %v1010 = vmul.f32 %v1007, %v1009
  %v1011 = vadd.f32 %v1007, %v1010
  %vm1012 = vweird.f32 %v1006
  %vm1013 = vweird.f32 %v1007
  %vm1014 = vmor %vm1012, %vm1013
  %v1015 = vsel %vm1014, %v1007, %v1011
  %v1016 = vand.u32 2147483647, %v1006
  %vm1017 = vcmp.eq.f32.partialorder %v1016, 8.507059e+37
  %v1018 = vand.u32 %v1006, 2147483648
  %v1019 = vor.u32 1.1754944e-38, %v1018
  %v1020 = vsel %vm1017, %v1019, %v1015
  %v1021 = vmul.f32 1.0, %v1020
  %v1022 = vsel %vm138, %v1002, %v1021
  %v1023 = vmul.f32 %v1022, %v900
  %1025 = vrot.lane.b32.xlu0 %v1022, 64
  %v1026 = vpop.permute.xlu0 %1025
  %v1028 = vmul.f32 %v1022, %v1026
  %1030 = vrot.lane.b32.xlu0 %v1028, 32
  %v1031 = vpop.permute.xlu0 %1030
  %v1033 = vadd.f32 %v1023, %v1031
  %v1034 = vtanh.pop %v1033
  %1036 = vrot.lane.b32.xlu0 %v1034, 64
  %v1037 = vpop.permute.xlu0 %1036
  %v1039 = vmul.f32 %v1022, %v1037
  %1042 = vrot.lane.b32.xlu0 %v973, 64
  %v1043 = vpop.permute.xlu0 %1042
  %v1045 = vsel %vm183, %v978, %v1043
  %v1047 = vsel %vm247, %v1045, 0
  %1049 = vmatpush.msra.mxu0 0.0
  %1050 = vmatpush.msra.mxu0 0.0
  %1051 = vmatpush.msra.mxu0 0.0
  %1052 = vmatpush.msra.mxu0 0.0
  %1053 = vmatpush.msra.mxu0 0.0
  %1054 = vmatpush.msra.mxu0 0.0
  %1055 = vmatpush.msra.mxu0 0.0
  %1056 = vmatpush.msra.mxu0 0.0
  %1057 = vmatpush.msra.mxu0 %v129
  %1058 = vmatpush.msra.mxu0 %v128
  %1059 = vmatpush.msra.mxu0 %v127
  %1060 = vmatpush.msra.mxu0 %v126
  %1061 = vmatpush.msra.mxu0 %v125
  %1062 = vmatpush.msra.mxu0 %v124
  %1063 = vmatpush.msra.mxu0 %v123
  %1064 = vmatpush.msra.mxu0 %v122
  %1065 = vmatmul.f32.gmra.mxu0 %v1047
  %v1066 = vpop.f32.mrf.mxu0
  %v1067 = vadd.f32 %v132, %v1066
  %1068 = vdwg.mxu0
  %v1069 = vtanh.pop %v1067
  %v1070 = vxor.u32 %v1067, 2147483648
  %v1071 = vmul.f32 %v1070, 1.442695
  %v1072 = vpow.pop %v1071
  %v1073 = vadd.f32 %v1072, 1.0
  %v1074 = vrcp.pop %v1073
  %v1075 = vmul.f32 %v1073, %v1074
  %v1076 = vsub.f32 1.0, %v1075
  %v1077 = vmul.f32 %v1074, %v1076
  %v1078 = vadd.f32 %v1074, %v1077
  %vm1079 = vweird.f32 %v1073
  %vm1080 = vweird.f32 %v1074
  %vm1081 = vmor %vm1079, %vm1080
  %v1082 = vsel %vm1081, %v1074, %v1078
  %v1083 = vand.u32 2147483647, %v1073
  %vm1084 = vcmp.eq.f32.partialorder %v1083, 8.507059e+37
  %v1085 = vand.u32 %v1073, 2147483648
  %v1086 = vor.u32 1.1754944e-38, %v1085
  %v1087 = vsel %vm1084, %v1086, %v1082
  %v1088 = vmul.f32 1.0, %v1087
  %v1089 = vsel %vm138, %v1069, %v1088
  %v1090 = vmul.f32 %v1089, %v967
  %1092 = vrot.lane.b32.xlu0 %v1089, 64
  %v1093 = vpop.permute.xlu0 %1092
  %v1095 = vmul.f32 %v1089, %v1093
  %1097 = vrot.lane.b32.xlu0 %v1095, 32
  %v1098 = vpop.permute.xlu0 %1097
  %v1100 = vadd.f32 %v1090, %v1098
  %v1101 = vtanh.pop %v1100
  %1103 = vrot.lane.b32.xlu0 %v1101, 64
  %v1104 = vpop.permute.xlu0 %1103
  %v1106 = vmul.f32 %v1089, %v1104
  %1108 = vrot.lane.b32.xlu0 %v1039, 32
  %v1109 = vpop.permute.xlu0 %1108
  %1112 = vrot.lane.b32.xlu0 %v1106, 64
  %v1113 = vpop.permute.xlu0 %1112
  %v1115 = vsel %vm183, %v1109, %v1113
  %v1117 = vsel %vm247, %v1115, 0
  %1119 = vmatpush.msra.mxu0 0.0
  %1120 = vmatpush.msra.mxu0 0.0
  %1121 = vmatpush.msra.mxu0 0.0
  %1122 = vmatpush.msra.mxu0 0.0
  %1123 = vmatpush.msra.mxu0 0.0
  %1124 = vmatpush.msra.mxu0 0.0
  %1125 = vmatpush.msra.mxu0 0.0
  %1126 = vmatpush.msra.mxu0 0.0
  %1127 = vmatpush.msra.mxu0 %v129
  %1128 = vmatpush.msra.mxu0 %v128
  %1129 = vmatpush.msra.mxu0 %v127
  %1130 = vmatpush.msra.mxu0 %v126
  %1131 = vmatpush.msra.mxu0 %v125
  %1132 = vmatpush.msra.mxu0 %v124
  %1133 = vmatpush.msra.mxu0 %v123
  %1134 = vmatpush.msra.mxu0 %v122
  %1135 = vmatmul.f32.gmra.mxu0 %v1117
  %v1136 = vpop.f32.mrf.mxu0
  %v1137 = vadd.f32 %v132, %v1136
  %1138 = vdwg.mxu0
  %v1139 = vtanh.pop %v1137
  %v1140 = vxor.u32 %v1137, 2147483648
  %v1141 = vmul.f32 %v1140, 1.442695
  %v1142 = vpow.pop %v1141
  %v1143 = vadd.f32 %v1142, 1.0
  %v1144 = vrcp.pop %v1143
  %v1145 = vmul.f32 %v1143, %v1144
  %v1146 = vsub.f32 1.0, %v1145
  %v1147 = vmul.f32 %v1144, %v1146
  %v1148 = vadd.f32 %v1144, %v1147
  %vm1149 = vweird.f32 %v1143
  %vm1150 = vweird.f32 %v1144
  %vm1151 = vmor %vm1149, %vm1150
  %v1152 = vsel %vm1151, %v1144, %v1148
  %v1153 = vand.u32 2147483647, %v1143
  %vm1154 = vcmp.eq.f32.partialorder %v1153, 8.507059e+37
  %v1155 = vand.u32 %v1143, 2147483648
  %v1156 = vor.u32 1.1754944e-38, %v1155
  %v1157 = vsel %vm1154, %v1156, %v1152
  %v1158 = vmul.f32 1.0, %v1157
  %v1159 = vsel %vm138, %v1139, %v1158
  %v1160 = vmul.f32 %v1159, %v1100
  %1162 = vrot.lane.b32.xlu0 %v1159, 64
  %v1163 = vpop.permute.xlu0 %1162
  %v1165 = vmul.f32 %v1159, %v1163
  %1167 = vrot.lane.b32.xlu0 %v1165, 32
  %v1168 = vpop.permute.xlu0 %1167
  %v1170 = vadd.f32 %v1160, %v1168
  %v1171 = vtanh.pop %v1170
  %1173 = vrot.lane.b32.xlu0 %v1171, 64
  %v1174 = vpop.permute.xlu0 %1173
  %v1176 = vmul.f32 %v1159, %v1174
  %v1177 = vld [vmem:[%s6] sm:$0xff]
  %v1178 = vld [vmem:[%s6 + $0x8] sm:$0xff]
  %v1179 = vld [vmem:[%s6 + $0x10] sm:$0xff]
  %v1180 = vld [vmem:[%s6 + $0x18] sm:$0xff]
  %v1181 = vld [vmem:[%s7] sm:$0x1]
  %v1183 = vperm.slane %v1181, 0
  %1186 = vrot.lane.b32.xlu0 %v1176, 32
  %v1187 = vpop.permute.xlu0 %1186
  %v1188 = vsel %vm183, %v1187, 0
  %1190 = vmatpush.msra.mxu0 0.0
  %1191 = vmatpush.msra.mxu0 0.0
  %1192 = vmatpush.msra.mxu0 0.0
  %1193 = vmatpush.msra.mxu0 0.0
  %1194 = vmatpush.msra.mxu0 0.0
  %1195 = vmatpush.msra.mxu0 0.0
  %1196 = vmatpush.msra.mxu0 0.0
  %1197 = vmatpush.msra.mxu0 0.0
  %1198 = vmatpush.msra.mxu0 0.0
  %1199 = vmatpush.msra.mxu0 0.0
  %1200 = vmatpush.msra.mxu0 0.0
  %1201 = vmatpush.msra.mxu0 0.0
  %1202 = vmatpush.msra.mxu0 %v1180
  %1203 = vmatpush.msra.mxu0 %v1179
  %1204 = vmatpush.msra.mxu0 %v1178
  %1205 = vmatpush.msra.mxu0 %v1177
  %1206 = vmatmul.f32.gmra.mxu0 %v1188
  %v1207 = vpop.f32.mrf.mxu0
  %v1208 = vadd.f32 %v1183, %v1207
  %1209 = vdwg.mxu0
  %vm1210 = vcmask 130048
  %1211 = vst.msk [vmem:[%s8] sm:$0xff] %vm1210, %v1208
  // Predicated region
  $region34: #{lstm_model_forward.1} parent=0 // pred_check
    _
  $region35: #{lstm_model_forward.1} parent=0 // pred_check_branch
    %1213 = sbr.rel (0) target = $region37
  $region36: #{lstm_model_forward.1} parent=0 // pred_region
    _
  $region37: #{lstm_model_forward.1} parent=0 // pred_fallthru
    _
  // Predicated region
  $region38: #{lstm_model_forward.1} parent=0 // pred_check
    _
  $region39: #{lstm_model_forward.1} parent=0 // pred_check_branch
    %1215 = sbr.rel (0) target = $region41
  $region40: #{lstm_model_forward.1} parent=0 // pred_region
    _
  $region41: #{lstm_model_forward.1} parent=0 // pred_fallthru
    _

</llo_original>
